<compile_context>
chip_gen: v5e
topology: v5e:2x2
jax: 0.10.0
libtpu: 0.0.40
codegen_flags: <defaults>
</compile_context>

<pallas_src>
import functools

import jax
import jax.numpy as jnp
from jax.experimental import pallas as pl
from jax.experimental.pallas import tpu as pltpu


def _round_up(x, m):
    return ((x + m - 1) // m) * m


def _hetero_gcn_kernel(adj_ref, hdst_ref, hsrc_ref, deginv_ref, ws_ref, wn_ref, b_ref,
                       out_ref, acc_ref, neigh_ref, *, inv_num_rels):
    """Grid = (dst_tiles, relations, src_tiles); src (k) innermost, relations (r) middle.

    The output block index is constant over (r, k), so out/acc stay resident across both
    reduction axes: acc is zeroed at (r==0, k==0) and written at the very last step.
    """
    r = pl.program_id(1)
    k = pl.program_id(2)
    last_r = pl.num_programs(1) - 1
    last_k = pl.num_programs(2) - 1

    @pl.when(jnp.logical_and(r == 0, k == 0))
    def _():
        acc_ref[...] = jnp.zeros_like(acc_ref)

    @pl.when(k == 0)
    def _():
        neigh_ref[...] = jnp.zeros_like(neigh_ref)

    # Partial A_r @ H over this source tile (f32 accumulation in VMEM scratch).
    neigh_ref[...] += jnp.dot(adj_ref[...], hsrc_ref[...],
                              preferred_element_type=jnp.float32)        # (TM, F)

    @pl.when(k == last_k)
    def _():
        # Mean aggregation with precomputed 1/in_degree, then the fused projection
        # H @ W_self + neigh @ W_neigh + b and ReLU.  Two dots against separate
        # weight refs (no lane-axis concatenate).
        neigh = neigh_ref[...] * deginv_ref[...]                         # (TM, F)
        out_r = (jnp.dot(hdst_ref[...], ws_ref[...],
                         preferred_element_type=jnp.float32)
                 + jnp.dot(neigh.astype(wn_ref.dtype), wn_ref[...],
                           preferred_element_type=jnp.float32)
                 + b_ref[...])                                           # (TM, Dp)
        acc_ref[...] += jnp.maximum(out_r, 0.0)

    @pl.when(jnp.logical_and(r == last_r, k == last_k))
    def _():
        # Deferred cross-relation mean.
        out_ref[...] = (acc_ref[...] * inv_num_rels).astype(out_ref.dtype)


def hetero_gcn_forward(adj, h, w_self, w_neigh, bias, *, tm=None, tk=None,
                       compute_dtype=jnp.bfloat16):
    """adj: (R, N, N) weighted adjacency (0 == no edge); h: (N, F);
    w_self/w_neigh: (R, F, D); bias: (R, D). Returns (N, D)."""
    R, N, N_src = adj.shape
    assert N == N_src, "expected square adjacency per relation"
    F = h.shape[1]
    D = w_self.shape[2]
    out_dtype = h.dtype

    # In-degree (edge count) from the ORIGINAL adjacency, before any low-precision cast.
    # For a static graph this (and the cast below) is computed once and amortized.
    deg = jnp.sum((adj != 0).astype(jnp.float32), axis=2)                # (R, N)
    deg_inv = (1.0 / jnp.maximum(deg, 1.0)).reshape(R, N, 1)

    # Low-precision compute path (default bf16; pass compute_dtype=None/float32 to disable).
    # TODO(synk): int8 (v5e/v6e) / fp8-e4m3 (v7x) adjacency path with a dequant scale
    # folded in after the A@H dot for another 2x traffic saving over bf16.
    if compute_dtype is not None:
        adj = adj.astype(compute_dtype)
        h = h.astype(compute_dtype)
        w_self = w_self.astype(compute_dtype)
        w_neigh = w_neigh.astype(compute_dtype)

    # Lane-dense output / weight padding (unmasked stores); padding sliced off at the end.
    d_pad = _round_up(D, 128)
    if d_pad != D:
        w_self = jnp.pad(w_self, ((0, 0), (0, 0), (0, d_pad - D)))
        w_neigh = jnp.pad(w_neigh, ((0, 0), (0, 0), (0, d_pad - D)))
        bias = jnp.pad(bias, ((0, 0), (0, d_pad - D)))
    bias3 = bias.reshape(R, 1, d_pad).astype(jnp.float32)

    adj_itemsize = jnp.dtype(adj.dtype).itemsize
    h_itemsize = jnp.dtype(h.dtype).itemsize
    w_itemsize = jnp.dtype(w_self.dtype).itemsize
    out_itemsize = jnp.dtype(out_dtype).itemsize

    # Generation-aware VMEM budget (v5e/v6e: 128 MiB, v7x: 64 MiB per TensorCore).
    try:
        vmem_cap = int(pltpu.get_tpu_info().vmem_capacity_bytes)
    except Exception:
        vmem_cap = 64 << 20
    adj_budget = max(8 << 20, vmem_cap // 3)     # budget for the double-buffered adj tile

    # Destination-node tile (multiple of 8 sublanes).
    if tm is None:
        tm = 256
    tm = max(8, (min(int(tm), _round_up(N, 8)) // 8) * 8)
    n_pad = _round_up(N, tm)
    if n_pad // tm < 2 and n_pad >= 16:
        # Guarantee >=2 dst tiles so the "parallel" axis spans both v7x TensorCores.
        tm = max(8, ((n_pad // 2) // 8) * 8)
        n_pad = _round_up(N, tm)
    num_tiles = n_pad // tm

    # Source-node tile (multiple of 128 lanes); keep the adj tile within the VMEM budget.
    if tk is None:
        max_tk = max(128, ((adj_budget // (2 * tm * adj_itemsize)) // 128) * 128)
        tk = min(_round_up(N, 128), max_tk, 4096)
    tk = max(128, (int(tk) // 128) * 128)
    ns_pad = _round_up(N, tk)
    num_k = ns_pad // tk

    # Pad operands (zero rows/cols contribute nothing; padded output rows are sliced off).
    h_dst = h if n_pad == N else jnp.pad(h, ((0, n_pad - N), (0, 0)))
    h_src = h if ns_pad == N else jnp.pad(h, ((0, ns_pad - N), (0, 0)))
    if n_pad != N or ns_pad != N:
        adj = jnp.pad(adj, ((0, 0), (0, n_pad - N), (0, ns_pad - N)))
    if n_pad != N:
        deg_inv = jnp.pad(deg_inv, ((0, 0), (0, n_pad - N), (0, 0)))

    # Explicit VMEM accounting (double buffers for pipelined inputs/outputs + scratch).
    vmem_bytes = int(
        2 * tm * tk * adj_itemsize            # adjacency tile
        + 2 * tk * F * h_itemsize             # H src tile
        + 2 * tm * F * h_itemsize             # H dst tile
        + 2 * tm * 4                          # 1/deg tile
        + 2 * 2 * F * d_pad * w_itemsize      # W_self + W_neigh
        + 2 * d_pad * 4                       # bias
        + 2 * tm * d_pad * out_itemsize       # output tile
        + tm * d_pad * 4 + tm * F * 4)        # accumulator scratches
    vmem_limit = min(max(int(1.5 * vmem_bytes), 32 << 20), int(vmem_cap * 0.75))

    # Advisory cost estimate so XLA schedules around a long, bandwidth-heavy call.
    flops = 2.0 * R * n_pad * ns_pad * F + 2.0 * R * n_pad * (2 * F) * d_pad
    bytes_accessed = (R * n_pad * ns_pad * adj_itemsize
                      + num_tiles * R * ns_pad * F * h_itemsize
                      + n_pad * F * h_itemsize
                      + R * n_pad * 4
                      + 2 * R * F * d_pad * w_itemsize
                      + n_pad * d_pad * out_itemsize)
    cost = pl.CostEstimate(flops=int(flops), transcendentals=0,
                           bytes_accessed=int(bytes_accessed))

    kernel = functools.partial(_hetero_gcn_kernel, inv_num_rels=1.0 / R)

    out = pl.pallas_call(
        kernel,
        out_shape=jax.ShapeDtypeStruct((n_pad, d_pad), out_dtype),
        grid_spec=pltpu.PrefetchScalarGridSpec(
            num_scalar_prefetch=0,
            grid=(num_tiles, R, num_k),                   # (dst tiles, relations, src tiles)
            in_specs=[
                pl.BlockSpec((pl.Squeezed(), tm, tk), lambda i, r, k: (r, i, k)),    # adj_r
                pl.BlockSpec((tm, F), lambda i, r, k: (i, 0)),                       # H dst
                pl.BlockSpec((tk, F), lambda i, r, k: (k, 0)),                       # H src
                pl.BlockSpec((pl.Squeezed(), tm, 1), lambda i, r, k: (r, i, 0)),     # 1/deg_r
                pl.BlockSpec((pl.Squeezed(), F, d_pad), lambda i, r, k: (r, 0, 0)),  # W_self_r
                pl.BlockSpec((pl.Squeezed(), F, d_pad), lambda i, r, k: (r, 0, 0)),  # W_neigh_r
                pl.BlockSpec((pl.Squeezed(), 1, d_pad), lambda i, r, k: (r, 0, 0)),  # bias_r
            ],
            out_specs=pl.BlockSpec((tm, d_pad), lambda i, r, k: (i, 0)),
            scratch_shapes=[pltpu.VMEM((tm, d_pad), jnp.float32),     # cross-relation acc
                            pltpu.VMEM((tm, F), jnp.float32)],        # partial A@H acc
        ),
        compiler_params=pltpu.CompilerParams(
            dimension_semantics=("parallel", "arbitrary", "arbitrary"),
            vmem_limit_bytes=int(vmem_limit)),
        cost_estimate=cost,
    )(adj, h_dst, h_src, deg_inv, w_self, w_neigh, bias3)

    return out[:N, :D]


def hetero_gcn_reference(adj, h, w_self, w_neigh, bias):
    """Pure-JAX f32 reference for correctness."""
    deg = jnp.sum((adj != 0).astype(jnp.float32), axis=2, keepdims=True)
    deg_inv = jnp.where(deg > 0, 1.0 / deg, 0.0)
    neigh = jnp.einsum("rnm,mf->rnf", adj, h) * deg_inv
    out = jax.nn.relu(jnp.einsum("nf,rfd->rnd", h, w_self)
                      + jnp.einsum("rnf,rfd->rnd", neigh, w_neigh)
                      + bias[:, None, :])
    return jnp.mean(out, axis=0)


if __name__ == "__main__":
    # Small synthetic problem: 3 relations (mods), 256 nodes, in_feats=32, rep_dim=32.
    R, N, F, D = 3, 256, 32, 32
    key = jax.random.PRNGKey(0)
    k_adj, k_mask, k_h, k_ws, k_wn, k_b = jax.random.split(key, 6)

    edge_mask = (jax.random.uniform(k_mask, (R, N, N)) < 0.25).astype(jnp.float32)
    edge_w = jax.random.uniform(k_adj, (R, N, N), minval=0.1, maxval=1.0)
    adj = edge_mask * edge_w                                  # weighted dense adjacency

    h = jax.random.normal(k_h, (N, F), dtype=jnp.float32)     # node embeddings
    w_self = jax.random.normal(k_ws, (R, F, D), dtype=jnp.float32) * 0.1
    w_neigh = jax.random.normal(k_wn, (R, F, D), dtype=jnp.float32) * 0.1
    bias = jax.random.normal(k_b, (R, D), dtype=jnp.float32) * 0.01

    ref = hetero_gcn_reference(adj, h, w_self, w_neigh, bias)

    # Default (bf16 compute) path.
    out = hetero_gcn_forward(adj, h, w_self, w_neigh, bias)
    out = jax.block_until_ready(out)
    assert out.shape == (N, D)
    assert jnp.allclose(out, ref, atol=3e-2, rtol=3e-2), float(jnp.max(jnp.abs(out - ref)))

    # Full-precision path (tight check of the exact forward semantics).
    out_f32 = hetero_gcn_forward(adj, h, w_self, w_neigh, bias, compute_dtype=jnp.float32)
    out_f32 = jax.block_until_ready(out_f32)
    assert jnp.allclose(out_f32, ref, atol=2e-3, rtol=2e-3), \
        float(jnp.max(jnp.abs(out_f32 - ref)))

    print("KERNEL_OK")
</pallas_src>

<mosaic_0001>
module attributes {stable_mosaic.version = 11 : i64} {
  func.func @_hetero_gcn_kernel(%arg0: i32, %arg1: i32, %arg2: i32, %arg3: memref<1x128x256xbf16, #tpu.memory_space<vmem>>, %arg4: memref<128x32xbf16, #tpu.memory_space<vmem>>, %arg5: memref<256x32xbf16, #tpu.memory_space<vmem>>, %arg6: memref<1x128x1xf32, #tpu.memory_space<vmem>>, %arg7: memref<1x32x128xbf16, #tpu.memory_space<vmem>>, %arg8: memref<1x32x128xbf16, #tpu.memory_space<vmem>>, %arg9: memref<1x1x128xf32, #tpu.memory_space<vmem>>, %arg10: memref<128x128xf32, #tpu.memory_space<vmem>>, %arg11: memref<128x128xf32, #tpu.memory_space<vmem>>, %arg12: memref<128x32xf32, #tpu.memory_space<vmem>>) attributes {dimension_semantics = [#tpu.dimension_semantics<parallel>, #tpu.dimension_semantics<arbitrary>, #tpu.dimension_semantics<arbitrary>], iteration_bounds = array<i64: 2, 3, 1>, scalar_prefetch = 0 : i64, scratch_operands = 2 : i64, tpu.core_type = #tpu.core_type<tc>, window_params = [{transform_indices = @transform_0, window_bounds = array<i64: 1, 128, 256>}, {transform_indices = @transform_1, window_bounds = array<i64: 128, 32>}, {transform_indices = @transform_2, window_bounds = array<i64: 256, 32>}, {transform_indices = @transform_3, window_bounds = array<i64: 1, 128, 1>}, {transform_indices = @transform_4, window_bounds = array<i64: 1, 32, 128>}, {transform_indices = @transform_5, window_bounds = array<i64: 1, 32, 128>}, {transform_indices = @transform_6, window_bounds = array<i64: 1, 1, 128>}, {transform_indices = @transform_7, window_bounds = array<i64: 128, 128>}]} {
    %c0_i32 = arith.constant 0 : i32
    %0 = arith.cmpi eq, %arg1, %c0_i32 : i32
    %c0_i32_0 = arith.constant 0 : i32
    %1 = arith.cmpi eq, %arg2, %c0_i32_0 : i32
    %2 = arith.andi %0, %1 : i1
    %3 = arith.extui %2 : i1 to i32
    %c0_i32_1 = arith.constant 0 : i32
    %4 = arith.cmpi ne, %3, %c0_i32_1 : i32
    scf.if %4 {
      %cst_16 = arith.constant 0.000000e+00 : f32
      %23 = vector.broadcast %cst_16 : f32 to vector<128x128xf32>
      %c0_17 = arith.constant 0 : index
      %c0_18 = arith.constant 0 : index
      %24 = vector.load %arg11[%c0_17, %c0_18] : memref<128x128xf32, #tpu.memory_space<vmem>>, vector<128x128xf32>
      tpu.vector_store %arg11[%c0_17, %c0_18], %23 {strides = array<i32>} : memref<128x128xf32, #tpu.memory_space<vmem>>, vector<128x128xf32>,
    } else {
    }
    %c0_i32_2 = arith.constant 0 : i32
    %5 = arith.cmpi eq, %arg2, %c0_i32_2 : i32
    %6 = arith.extui %5 : i1 to i32
    %c0_i32_3 = arith.constant 0 : i32
    %7 = arith.cmpi ne, %6, %c0_i32_3 : i32
    scf.if %7 {
      %cst_16 = arith.constant 0.000000e+00 : f32
      %23 = vector.broadcast %cst_16 : f32 to vector<128x32xf32>
      %c0_17 = arith.constant 0 : index
      %c0_18 = arith.constant 0 : index
      %24 = vector.load %arg12[%c0_17, %c0_18] : memref<128x32xf32, #tpu.memory_space<vmem>>, vector<128x32xf32>
      tpu.vector_store %arg12[%c0_17, %c0_18], %23 {strides = array<i32>} : memref<128x32xf32, #tpu.memory_space<vmem>>, vector<128x32xf32>,
    } else {
    }
    %c0 = arith.constant 0 : index
    %c0_4 = arith.constant 0 : index
    %8 = vector.load %arg12[%c0, %c0_4] : memref<128x32xf32, #tpu.memory_space<vmem>>, vector<128x32xf32>
    %c0_5 = arith.constant 0 : index
    %c0_6 = arith.constant 0 : index
    %c0_7 = arith.constant 0 : index
    %9 = vector.load %arg3[%c0_5, %c0_6, %c0_7] : memref<1x128x256xbf16, #tpu.memory_space<vmem>>, vector<1x128x256xbf16>
    %10 = vector.shape_cast %9 : vector<1x128x256xbf16> to vector<128x256xbf16>
    %c0_8 = arith.constant 0 : index
    %c0_9 = arith.constant 0 : index
    %11 = vector.load %arg5[%c0_8, %c0_9] : memref<256x32xbf16, #tpu.memory_space<vmem>>, vector<256x32xbf16>
    %cst = arith.constant dense<0.000000e+00> : vector<128x32xf32>
    %12 = tpu.matmul %10, %11, %cst {dimension_numbers = #tpu.dot_dimension_numbers<[1], [0], [0], [1], [0, 0, 1, 1], [], []>} : vector<128x256xbf16>, vector<256x32xbf16>, vector<128x32xf32> -> vector<128x32xf32>
    %13 = arith.addf %8, %12 : vector<128x32xf32>
    %c0_10 = arith.constant 0 : index
    %c0_11 = arith.constant 0 : index
    %14 = vector.load %arg12[%c0_10, %c0_11] : memref<128x32xf32, #tpu.memory_space<vmem>>, vector<128x32xf32>
    tpu.vector_store %arg12[%c0_10, %c0_11], %13 {strides = array<i32>} : memref<128x32xf32, #tpu.memory_space<vmem>>, vector<128x32xf32>,
    %c0_i32_12 = arith.constant 0 : i32
    %15 = arith.cmpi eq, %arg2, %c0_i32_12 : i32
    %16 = arith.extui %15 : i1 to i32
    %c0_i32_13 = arith.constant 0 : i32
    %17 = arith.cmpi ne, %16, %c0_i32_13 : i32
    scf.if %17 {
      %c0_16 = arith.constant 0 : index
      %c0_17 = arith.constant 0 : index
      %23 = vector.load %arg12[%c0_16, %c0_17] : memref<128x32xf32, #tpu.memory_space<vmem>>, vector<128x32xf32>
      %c0_18 = arith.constant 0 : index
      %c0_19 = arith.constant 0 : index
      %c0_20 = arith.constant 0 : index
      %24 = vector.load %arg6[%c0_18, %c0_19, %c0_20] : memref<1x128x1xf32, #tpu.memory_space<vmem>>, vector<1x128x1xf32>
      %25 = vector.shape_cast %24 : vector<1x128x1xf32> to vector<128x1xf32>
      %26 = vector.broadcast %25 : vector<128x1xf32> to vector<128x32xf32>
      %27 = arith.mulf %23, %26 : vector<128x32xf32>
      %c0_21 = arith.constant 0 : index
      %c0_22 = arith.constant 0 : index
      %28 = vector.load %arg4[%c0_21, %c0_22] : memref<128x32xbf16, #tpu.memory_space<vmem>>, vector<128x32xbf16>
      %c0_23 = arith.constant 0 : index
      %c0_24 = arith.constant 0 : index
      %c0_25 = arith.constant 0 : index
      %29 = vector.load %arg7[%c0_23, %c0_24, %c0_25] : memref<1x32x128xbf16, #tpu.memory_space<vmem>>, vector<1x32x128xbf16>
      %30 = vector.shape_cast %29 : vector<1x32x128xbf16> to vector<32x128xbf16>
      %cst_26 = arith.constant dense<0.000000e+00> : vector<128x128xf32>
      %31 = tpu.matmul %28, %30, %cst_26 {dimension_numbers = #tpu.dot_dimension_numbers<[1], [0], [0], [1], [0, 0, 1, 1], [], []>} : vector<128x32xbf16>, vector<32x128xbf16>, vector<128x128xf32> -> vector<128x128xf32>
      %32 = arith.truncf %27 : vector<128x32xf32> to vector<128x32xbf16>
      %c0_27 = arith.constant 0 : index
      %c0_28 = arith.constant 0 : index
      %c0_29 = arith.constant 0 : index
      %33 = vector.load %arg8[%c0_27, %c0_28, %c0_29] : memref<1x32x128xbf16, #tpu.memory_space<vmem>>, vector<1x32x128xbf16>
      %34 = vector.shape_cast %33 : vector<1x32x128xbf16> to vector<32x128xbf16>
      %cst_30 = arith.constant dense<0.000000e+00> : vector<128x128xf32>
      %35 = tpu.matmul %32, %34, %cst_30 {dimension_numbers = #tpu.dot_dimension_numbers<[1], [0], [0], [1], [0, 0, 1, 1], [], []>} : vector<128x32xbf16>, vector<32x128xbf16>, vector<128x128xf32> -> vector<128x128xf32>
      %36 = arith.addf %31, %35 : vector<128x128xf32>
      %c0_31 = arith.constant 0 : index
      %c0_32 = arith.constant 0 : index
      %c0_33 = arith.constant 0 : index
      %37 = vector.load %arg9[%c0_31, %c0_32, %c0_33] : memref<1x1x128xf32, #tpu.memory_space<vmem>>, vector<1x1x128xf32>
      %38 = vector.shape_cast %37 : vector<1x1x128xf32> to vector<1x128xf32>
      %39 = vector.broadcast %38 : vector<1x128xf32> to vector<128x128xf32>
      %40 = arith.addf %36, %39 : vector<128x128xf32>
      %c0_34 = arith.constant 0 : index
      %c0_35 = arith.constant 0 : index
      %41 = vector.load %arg11[%c0_34, %c0_35] : memref<128x128xf32, #tpu.memory_space<vmem>>, vector<128x128xf32>
      %cst_36 = arith.constant 0.000000e+00 : f32
      %42 = vector.broadcast %cst_36 : f32 to vector<128x128xf32>
      %43 = arith.maximumf %40, %42 : vector<128x128xf32>
      %44 = arith.addf %41, %43 : vector<128x128xf32>
      %c0_37 = arith.constant 0 : index
      %c0_38 = arith.constant 0 : index
      %45 = vector.load %arg11[%c0_37, %c0_38] : memref<128x128xf32, #tpu.memory_space<vmem>>, vector<128x128xf32>
      tpu.vector_store %arg11[%c0_37, %c0_38], %44 {strides = array<i32>} : memref<128x128xf32, #tpu.memory_space<vmem>>, vector<128x128xf32>,
    } else {
    }
    %c2_i32 = arith.constant 2 : i32
    %18 = arith.cmpi eq, %arg1, %c2_i32 : i32
    %c0_i32_14 = arith.constant 0 : i32
    %19 = arith.cmpi eq, %arg2, %c0_i32_14 : i32
    %20 = arith.andi %18, %19 : i1
    %21 = arith.extui %20 : i1 to i32
    %c0_i32_15 = arith.constant 0 : i32
    %22 = arith.cmpi ne, %21, %c0_i32_15 : i32
    scf.if %22 {
      %c0_16 = arith.constant 0 : index
      %c0_17 = arith.constant 0 : index
      %23 = vector.load %arg11[%c0_16, %c0_17] : memref<128x128xf32, #tpu.memory_space<vmem>>, vector<128x128xf32>
      %cst_18 = arith.constant 0.333333343 : f32
      %24 = vector.broadcast %cst_18 : f32 to vector<128x128xf32>
      %25 = arith.mulf %23, %24 : vector<128x128xf32>
      %c0_19 = arith.constant 0 : index
      %c0_20 = arith.constant 0 : index
      %26 = vector.load %arg10[%c0_19, %c0_20] : memref<128x128xf32, #tpu.memory_space<vmem>>, vector<128x128xf32>
      tpu.vector_store %arg10[%c0_19, %c0_20], %25 {strides = array<i32>} : memref<128x128xf32, #tpu.memory_space<vmem>>, vector<128x128xf32>,
    } else {
    }
    return
  }
  func.func @transform_0(%arg0: i32, %arg1: i32, %arg2: i32) -> (i32, i32, i32) {
    %c0_i32 = arith.constant 0 : i32
    return %arg1, %arg0, %arg2 : i32, i32, i32
  }
  func.func @transform_1(%arg0: i32, %arg1: i32, %arg2: i32) -> (i32, i32) {
    %c0_i32 = arith.constant 0 : i32
    %c0_i32_0 = arith.constant 0 : i32
    return %arg0, %c0_i32 : i32, i32
  }
  func.func @transform_2(%arg0: i32, %arg1: i32, %arg2: i32) -> (i32, i32) {
    %c0_i32 = arith.constant 0 : i32
    %c0_i32_0 = arith.constant 0 : i32
    return %arg2, %c0_i32 : i32, i32
  }
  func.func @transform_3(%arg0: i32, %arg1: i32, %arg2: i32) -> (i32, i32, i32) {
    %c0_i32 = arith.constant 0 : i32
    %c0_i32_0 = arith.constant 0 : i32
    return %arg1, %arg0, %c0_i32 : i32, i32, i32
  }
  func.func @transform_4(%arg0: i32, %arg1: i32, %arg2: i32) -> (i32, i32, i32) {
    %c0_i32 = arith.constant 0 : i32
    %c0_i32_0 = arith.constant 0 : i32
    %c0_i32_1 = arith.constant 0 : i32
    return %arg1, %c0_i32, %c0_i32_0 : i32, i32, i32
  }
  func.func @transform_5(%arg0: i32, %arg1: i32, %arg2: i32) -> (i32, i32, i32) {
    %c0_i32 = arith.constant 0 : i32
    %c0_i32_0 = arith.constant 0 : i32
    %c0_i32_1 = arith.constant 0 : i32
    return %arg1, %c0_i32, %c0_i32_0 : i32, i32, i32
  }
  func.func @transform_6(%arg0: i32, %arg1: i32, %arg2: i32) -> (i32, i32, i32) {
    %c0_i32 = arith.constant 0 : i32
    %c0_i32_0 = arith.constant 0 : i32
    %c0_i32_1 = arith.constant 0 : i32
    return %arg1, %c0_i32, %c0_i32_0 : i32, i32, i32
  }
  func.func @transform_7(%arg0: i32, %arg1: i32, %arg2: i32) -> (i32, i32) {
    %c0_i32 = arith.constant 0 : i32
    %c0_i32_0 = arith.constant 0 : i32
    return %arg0, %c0_i32 : i32, i32
  }
}

</mosaic_0001>

<llo_original>
// kernel: tpu_custom_call.1
$region0: #{tpu_custom_call.1}
  #allocation0 [shape = 'u32[]', space=smem, size = 0x4, offset = 0x4, fixed_abs, tag = 'smem constant byte address 0x4 - core index']
  #allocation1 [shape = 'u32[72,128]{1,0:T(1,128)}', space=vmem, size = 0x9000, scoped, tag = 'internal scratch']
  #allocation2 [shape = 'f32[128,128]{1,0:T(8,128)}', space=vmem, size = 0x10000, scoped, tag = 'scratch operand']
  #allocation3 [shape = 'f32[128,32]{1,0:T(8,128)}', space=vmem, size = 0x10000, scoped, tag = 'scratch operand']
  %s0 = inlined_call_operand.vmem [shape: bf16[3,256,256], index: 0, kind: input, shape index: {}]
  %s1 = inlined_call_operand.vmem [shape: bf16[256,32], index: 1, kind: input, shape index: {}]
  %s2 = inlined_call_operand.vmem [shape: bf16[256,32], index: 2, kind: input, shape index: {}]
  %s3 = inlined_call_operand.vmem [shape: f32[3,256,1], index: 3, kind: input, shape index: {}]
  %s4 = inlined_call_operand.vmem [shape: bf16[3,32,128], index: 4, kind: input, shape index: {}]
  %s5 = inlined_call_operand.vmem [shape: bf16[3,32,128], index: 5, kind: input, shape index: {}]
  %s6 = inlined_call_operand.vmem [shape: f32[3,1,128], index: 6, kind: input, shape index: {}]
  %s7 = inlined_call_operand.hbm [shape: f32[256,128], index: 7, kind: output, shape index: {}]
  %s8 = sld [smem:[#allocation0]]
  $region77: #{tpu_custom_call.1} parent=0
    _
  %s10 = ssub.s32 1, %s8
  %s11 = scalar_select 0, %s10, %s8
  $region1: #{tpu_custom_call.1} parent=0
    #allocation4 [shape = 'u8[131072]{0}', space=vmem, size = 0x20000, scoped, tag = 'output window, operand 0']
    #allocation5 [shape = 's32[2]{0}', space=sflag, size = 0x8, scoped, tag = 'scoped memory for tpu_custom_call.1']
    %12 = vsyncpa [#allocation5], 0
    %s13 = scalar_lea.sflag [#allocation5], 1
    %14 = vsyncpa %s13, 0
    loop: start=0, step=1, limit=8
    $region2: #{tpu_custom_call.1} parent=1 // loop_pre_header
      _
    $region3: #{tpu_custom_call.1} parent=1 // loop_header
      %s16 = sphi 0, %s20
      %p17 = scmp.ge.s32.totalorder %s16, 8
      %s23 = sphi 0, %s42
      %s24 = sphi 0, %s38
      %s25 = sphi 0, %s34
      %s26 = sphi 0, %s23
      %s27 = sphi 0, %s24
      %s28 = sphi 0, %s25
      %s29 = sphi 0, %s26
      %s30 = sphi 0, %s27
      %s31 = sphi 0, %s28
      %s49 = sphi 0, %s51
      %s52 = sphi 0, %s49
      %s53 = sphi 0, %s52
      %s69 = sphi 0, %s53
      %s75 = sphi 0, %s77
      %s78 = sphi 0, %s75
      %s79 = sphi 0, %s78
      %s95 = sphi 0, %s79
      %s101 = sphi 0, %s103
      %s104 = sphi 0, %s101
      %s105 = sphi 0, %s104
      %s121 = sphi 0, %s105
      %s129 = sphi 0, %s131
      %s132 = sphi 0, %s129
      %s133 = sphi 0, %s132
      %s149 = sphi 0, %s133
      %s155 = sphi 0, %s157
      %s158 = sphi 0, %s155
      %s159 = sphi 0, %s158
      %s175 = sphi 0, %s159
      %s181 = sphi 0, %s183
      %s184 = sphi 0, %s181
      %s185 = sphi 0, %s184
      %s201 = sphi 0, %s185
      %s207 = sphi 0, %s209
      %s210 = sphi 0, %s207
      %s211 = sphi 0, %s210
      %s227 = sphi 0, %s211
      %s233 = sphi 0, %s235
      %s236 = sphi 0, %s233
      %s237 = sphi 0, %s236
      %s253 = sphi 0, %s237
    $region4: #{tpu_custom_call.1} parent=1 // loop_header_branch
      %19 = sbr.rel (%p17) target = $region8
    $region5: #{tpu_custom_call.1} parent=1 // loop_body
      %s21 = ssub.s32 %s16, 1
      %s22 = ssub.s32 %s16, 2
      %s32 = sadd.s32 1, %s25
      %p33 = scmp.ge.s32.totalorder %s32, 1
      %s34 = scalar_select %p33, 0, %s32
      %s35 = sadd.s32 1, %s24
      %s36 = scalar_select %p33, %s35, %s24
      %p37 = scmp.ge.s32.totalorder %s36, 3
      %s38 = scalar_select %p37, 0, %s36
      %s39 = sadd.s32 1, %s23
      %s40 = scalar_select %p37, %s39, %s23
      %p41 = scmp.ge.s32.totalorder %s40, 2
      %s42 = scalar_select %p41, 0, %s40
      %s43 = ssub.s32 %s24, %s38
      %s44 = ssub.s32 %s23, %s42
      %s45 = sor.u32 %s43, %s44
      %s46 = ssub.s32 %s25, %s34
      %s47 = sor.u32 %s45, %s46
      %p48 = scmp.eq.s32.totalorder %s47, 0
      %s50 = sadd.s32 %s49, 1
      %s51 = scalar_select %p48, %s49, %s50
      %p54 = pneg %p48
      %p55 = scmp.eq.s32.totalorder %s16, 5
      %p56 = por %p54, %p55
      %p57 = scmp.ne.s32.totalorder %s49, %s52
      %p58 = scmp.eq.s32.totalorder %s16, 0
      %p59 = por %p57, %p58
      %p60 = scmp.ne.s32.totalorder %s49, %s52
      %p61 = scmp.eq.s32.totalorder %s21, 5
      %p62 = por %p60, %p61
      %p63 = scmp.ne.s32.totalorder %s52, %s53
      %p64 = scmp.eq.s32.totalorder %s21, 0
      %p65 = por %p63, %p64
      %p66 = scmp.ne.s32.totalorder %s52, %s53
      %p67 = scmp.eq.s32.totalorder %s22, 5
      %p68 = por %p66, %p67
      %p70 = scmp.ne.s32.totalorder %s53, %s69
      %p71 = scmp.eq.s32.totalorder %s22, 0
      %p72 = por %p70, %p71
      %s73 = ssub.s32 %s23, %s42
      %p74 = scmp.eq.s32.totalorder %s73, 0
      %s76 = sadd.s32 %s75, 1
      %s77 = scalar_select %p74, %s75, %s76
      %p80 = pneg %p74
      %p81 = scmp.eq.s32.totalorder %s16, 5
      %p82 = por %p80, %p81
      %p83 = scmp.ne.s32.totalorder %s75, %s78
      %p84 = scmp.eq.s32.totalorder %s16, 0
      %p85 = por %p83, %p84
      %p86 = scmp.ne.s32.totalorder %s75, %s78
      %p87 = scmp.eq.s32.totalorder %s21, 5
      %p88 = por %p86, %p87
      %p89 = scmp.ne.s32.totalorder %s78, %s79
      %p90 = scmp.eq.s32.totalorder %s21, 0
      %p91 = por %p89, %p90
      %p92 = scmp.ne.s32.totalorder %s78, %s79
      %p93 = scmp.eq.s32.totalorder %s22, 5
      %p94 = por %p92, %p93
      %p96 = scmp.ne.s32.totalorder %s79, %s95
      %p97 = scmp.eq.s32.totalorder %s22, 0
      %p98 = por %p96, %p97
      %s99 = ssub.s32 %s25, %s34
      %p100 = scmp.eq.s32.totalorder %s99, 0
      %s102 = sadd.s32 %s101, 1
      %s103 = scalar_select %p100, %s101, %s102
      %p106 = pneg %p100
      %p107 = scmp.eq.s32.totalorder %s16, 5
      %p108 = por %p106, %p107
      %p109 = scmp.ne.s32.totalorder %s101, %s104
      %p110 = scmp.eq.s32.totalorder %s16, 0
      %p111 = por %p109, %p110
      %p112 = scmp.ne.s32.totalorder %s101, %s104
      %p113 = scmp.eq.s32.totalorder %s21, 5
      %p114 = por %p112, %p113
      %p115 = scmp.ne.s32.totalorder %s104, %s105
      %p116 = scmp.eq.s32.totalorder %s21, 0
      %p117 = por %p115, %p116
      %p118 = scmp.ne.s32.totalorder %s104, %s105
      %p119 = scmp.eq.s32.totalorder %s22, 5
      %p120 = por %p118, %p119
      %p122 = scmp.ne.s32.totalorder %s105, %s121
      %p123 = scmp.eq.s32.totalorder %s22, 0
      %p124 = por %p122, %p123
      %s125 = ssub.s32 %s24, %s38
      %s126 = ssub.s32 %s23, %s42
      %s127 = sor.u32 %s125, %s126
      %p128 = scmp.eq.s32.totalorder %s127, 0
      %s130 = sadd.s32 %s129, 1
      %s131 = scalar_select %p128, %s129, %s130
      %p134 = pneg %p128
      %p135 = scmp.eq.s32.totalorder %s16, 5
      %p136 = por %p134, %p135
      %p137 = scmp.ne.s32.totalorder %s129, %s132
      %p138 = scmp.eq.s32.totalorder %s16, 0
      %p139 = por %p137, %p138
      %p140 = scmp.ne.s32.totalorder %s129, %s132
      %p141 = scmp.eq.s32.totalorder %s21, 5
      %p142 = por %p140, %p141
      %p143 = scmp.ne.s32.totalorder %s132, %s133
      %p144 = scmp.eq.s32.totalorder %s21, 0
      %p145 = por %p143, %p144
      %p146 = scmp.ne.s32.totalorder %s132, %s133
      %p147 = scmp.eq.s32.totalorder %s22, 5
      %p148 = por %p146, %p147
      %p150 = scmp.ne.s32.totalorder %s133, %s149
      %p151 = scmp.eq.s32.totalorder %s22, 0
      %p152 = por %p150, %p151
      %s153 = ssub.s32 %s24, %s38
      %p154 = scmp.eq.s32.totalorder %s153, 0
      %s156 = sadd.s32 %s155, 1
      %s157 = scalar_select %p154, %s155, %s156
      %p160 = pneg %p154
      %p161 = scmp.eq.s32.totalorder %s16, 5
      %p162 = por %p160, %p161
      %p163 = scmp.ne.s32.totalorder %s155, %s158
      %p164 = scmp.eq.s32.totalorder %s16, 0
      %p165 = por %p163, %p164
      %p166 = scmp.ne.s32.totalorder %s155, %s158
      %p167 = scmp.eq.s32.totalorder %s21, 5
      %p168 = por %p166, %p167
      %p169 = scmp.ne.s32.totalorder %s158, %s159
      %p170 = scmp.eq.s32.totalorder %s21, 0
      %p171 = por %p169, %p170
      %p172 = scmp.ne.s32.totalorder %s158, %s159
      %p173 = scmp.eq.s32.totalorder %s22, 5
      %p174 = por %p172, %p173
      %p176 = scmp.ne.s32.totalorder %s159, %s175
      %p177 = scmp.eq.s32.totalorder %s22, 0
      %p178 = por %p176, %p177
      %s179 = ssub.s32 %s24, %s38
      %p180 = scmp.eq.s32.totalorder %s179, 0
      %s182 = sadd.s32 %s181, 1
      %s183 = scalar_select %p180, %s181, %s182
      %p186 = pneg %p180
      %p187 = scmp.eq.s32.totalorder %s16, 5
      %p188 = por %p186, %p187
      %p189 = scmp.ne.s32.totalorder %s181, %s184
      %p190 = scmp.eq.s32.totalorder %s16, 0
      %p191 = por %p189, %p190
      %p192 = scmp.ne.s32.totalorder %s181, %s184
      %p193 = scmp.eq.s32.totalorder %s21, 5
      %p194 = por %p192, %p193
      %p195 = scmp.ne.s32.totalorder %s184, %s185
      %p196 = scmp.eq.s32.totalorder %s21, 0
      %p197 = por %p195, %p196
      %p198 = scmp.ne.s32.totalorder %s184, %s185
      %p199 = scmp.eq.s32.totalorder %s22, 5
      %p200 = por %p198, %p199
      %p202 = scmp.ne.s32.totalorder %s185, %s201
      %p203 = scmp.eq.s32.totalorder %s22, 0
      %p204 = por %p202, %p203
      %s205 = ssub.s32 %s24, %s38
      %p206 = scmp.eq.s32.totalorder %s205, 0
      %s208 = sadd.s32 %s207, 1
      %s209 = scalar_select %p206, %s207, %s208
      %p212 = pneg %p206
      %p213 = scmp.eq.s32.totalorder %s16, 5
      %p214 = por %p212, %p213
      %p215 = scmp.ne.s32.totalorder %s207, %s210
      %p216 = scmp.eq.s32.totalorder %s16, 0
      %p217 = por %p215, %p216
      %p218 = scmp.ne.s32.totalorder %s207, %s210
      %p219 = scmp.eq.s32.totalorder %s21, 5
      %p220 = por %p218, %p219
      %p221 = scmp.ne.s32.totalorder %s210, %s211
      %p222 = scmp.eq.s32.totalorder %s21, 0
      %p223 = por %p221, %p222
      %p224 = scmp.ne.s32.totalorder %s210, %s211
      %p225 = scmp.eq.s32.totalorder %s22, 5
      %p226 = por %p224, %p225
      %p228 = scmp.ne.s32.totalorder %s211, %s227
      %p229 = scmp.eq.s32.totalorder %s22, 0
      %p230 = por %p228, %p229
      %s231 = ssub.s32 %s23, %s42
      %p232 = scmp.eq.s32.totalorder %s231, 0
      %s234 = sadd.s32 %s233, 1
      %s235 = scalar_select %p232, %s233, %s234
      %p238 = pneg %p232
      %p239 = scmp.eq.s32.totalorder %s16, 5
      %p240 = por %p238, %p239
      %p241 = scmp.ne.s32.totalorder %s233, %s236
      %p242 = scmp.eq.s32.totalorder %s16, 0
      %p243 = por %p241, %p242
      %p244 = scmp.ne.s32.totalorder %s233, %s236
      %p245 = scmp.eq.s32.totalorder %s21, 5
      %p246 = por %p244, %p245
      %p247 = scmp.ne.s32.totalorder %s236, %s237
      %p248 = scmp.eq.s32.totalorder %s21, 0
      %p249 = por %p247, %p248
      %p250 = scmp.ne.s32.totalorder %s236, %s237
      %p251 = scmp.eq.s32.totalorder %s22, 5
      %p252 = por %p250, %p251
      %p254 = scmp.ne.s32.totalorder %s237, %s253
      %p255 = scmp.eq.s32.totalorder %s22, 0
      %p256 = por %p254, %p255
      %p257 = scmp.le.s32.totalorder 1, %s16
      %p258 = scmp.lt.s32.totalorder %s16, 7
      %p259 = pnand %p257, %p258
      %p260 = pneg %p259
      // Predicated region
      $region9: #{tpu_custom_call.1} parent=5 // pred_check
        _
      $region10: #{tpu_custom_call.1} parent=5 // pred_check_branch
        %262 = sbr.rel (%p259) target = $region12
      $region11: #{tpu_custom_call.1} parent=5 // pred_region
        %s263 = ssub.s32 %s16, 1
        // Predicated region
        $region13: #{tpu_custom_call.1} parent=11 // pred_check
          %p264 = pneg %p117
        $region14: #{tpu_custom_call.1} parent=11 // pred_check_branch
          %266 = sbr.rel (%p264) target = $region16
        $region15: #{tpu_custom_call.1} parent=11 // pred_region
          %s267 = smul.u32 32, %s28
          %p268 = scmp.lt.s32.totalorder %s267, 31
          %s269 = scalar_select %p268, %s267, 31
          %s270 = smul.addr %s269, 4
          %s271 = scalar_lea.vmem %s2, %s270
          %s272 = smul.u32 32, %s28
        $region16: #{tpu_custom_call.1} parent=11 // pred_fallthru
          _
      $region12: #{tpu_custom_call.1} parent=5 // pred_fallthru
        _
      %p273 = scmp.lt.s32.totalorder %s16, 6
      // Predicated region
      $region17: #{tpu_custom_call.1} parent=5 // pred_check
        %p274 = pneg %p273
      $region18: #{tpu_custom_call.1} parent=5 // pred_check_branch
        %276 = sbr.rel (%p274) target = $region20
      $region19: #{tpu_custom_call.1} parent=5 // pred_region
        // Predicated region
        $region21: #{tpu_custom_call.1} parent=19 // pred_check
          %p277 = pneg %p59
        $region22: #{tpu_custom_call.1} parent=19 // pred_check_branch
          %279 = sbr.rel (%p277) target = $region24
        $region23: #{tpu_custom_call.1} parent=19 // pred_region
          %s280 = smul.u32 16, %s23
          %s281 = smul.u32 2, %s25
          %p282 = scmp.lt.s32.totalorder %s24, 2
          %s283 = scalar_select %p282, %s24, 2
          %p284 = scmp.lt.s32.totalorder %s280, 31
          %s285 = scalar_select %p284, %s280, 31
          %p286 = scmp.lt.s32.totalorder %s281, 1
          %s287 = scalar_select %p286, %s281, 1
          %s288 = smul.addr %s285, 2
          %s289 = sadd.s32 %s287, %s288
          %s290 = smul.addr %s283, 64
          %s291 = sadd.s32 %s289, %s290
          %s292 = smul.addr %s291, 4
          %s293 = scalar_lea.vmem %s0, %s292
          %s294 = smul.u32 16, %s23
          %s295 = smul.u32 2, %s25
        $region24: #{tpu_custom_call.1} parent=19 // pred_fallthru
          _
        // Predicated region
        $region25: #{tpu_custom_call.1} parent=19 // pred_check
          %p296 = pneg %p85
        $region26: #{tpu_custom_call.1} parent=19 // pred_check_branch
          %298 = sbr.rel (%p296) target = $region28
        $region27: #{tpu_custom_call.1} parent=19 // pred_region
          %s299 = smul.u32 16, %s23
          %p300 = scmp.lt.s32.totalorder %s299, 31
          %s301 = scalar_select %p300, %s299, 31
          %s302 = smul.addr %s301, 4
          %s303 = scalar_lea.vmem %s1, %s302
          %s304 = smul.u32 16, %s23
        $region28: #{tpu_custom_call.1} parent=19 // pred_fallthru
          _
        // Predicated region
        $region29: #{tpu_custom_call.1} parent=19 // pred_check
          %p305 = pneg %p139
        $region30: #{tpu_custom_call.1} parent=19 // pred_check_branch
          %307 = sbr.rel (%p305) target = $region32
        $region31: #{tpu_custom_call.1} parent=19 // pred_region
          %s308 = smul.u32 16, %s23
          %p309 = scmp.lt.s32.totalorder %s24, 2
          %s310 = scalar_select %p309, %s24, 2
          %p311 = scmp.lt.s32.totalorder %s308, 31
          %s312 = scalar_select %p311, %s308, 31
          %s313 = smul.addr %s310, 32
          %s314 = sadd.s32 %s312, %s313
          %s315 = smul.addr %s314, 8
          %s316 = scalar_lea.vmem %s3, %s315
          %s317 = smul.u32 16, %s23
        $region32: #{tpu_custom_call.1} parent=19 // pred_fallthru
          _
        // Predicated region
        $region33: #{tpu_custom_call.1} parent=19 // pred_check
          %p318 = pneg %p165
        $region34: #{tpu_custom_call.1} parent=19 // pred_check_branch
          %320 = sbr.rel (%p318) target = $region36
        $region35: #{tpu_custom_call.1} parent=19 // pred_region
          %p321 = scmp.lt.s32.totalorder %s24, 2
          %s322 = scalar_select %p321, %s24, 2
          %s323 = smul.addr %s322, 4
          %s324 = smul.addr %s323, 4
          %s325 = scalar_lea.vmem %s4, %s324
        $region36: #{tpu_custom_call.1} parent=19 // pred_fallthru
          _
        // Predicated region
        $region37: #{tpu_custom_call.1} parent=19 // pred_check
          %p326 = pneg %p191
        $region38: #{tpu_custom_call.1} parent=19 // pred_check_branch
          %328 = sbr.rel (%p326) target = $region40
        $region39: #{tpu_custom_call.1} parent=19 // pred_region
          %p329 = scmp.lt.s32.totalorder %s24, 2
          %s330 = scalar_select %p329, %s24, 2
          %s331 = smul.addr %s330, 4
          %s332 = smul.addr %s331, 4
          %s333 = scalar_lea.vmem %s5, %s332
        $region40: #{tpu_custom_call.1} parent=19 // pred_fallthru
          _
        // Predicated region
        $region41: #{tpu_custom_call.1} parent=19 // pred_check
          %p334 = pneg %p217
        $region42: #{tpu_custom_call.1} parent=19 // pred_check_branch
          %336 = sbr.rel (%p334) target = $region44
        $region43: #{tpu_custom_call.1} parent=19 // pred_region
          %p337 = scmp.lt.s32.totalorder %s24, 2
          %s338 = scalar_select %p337, %s24, 2
          %s339 = scalar_lea.vmem %s6, %s338
        $region44: #{tpu_custom_call.1} parent=19 // pred_fallthru
          _
      $region20: #{tpu_custom_call.1} parent=5 // pred_fallthru
        _
      %p340 = scmp.le.s32.totalorder 1, %s16
      %p341 = scmp.lt.s32.totalorder %s16, 7
      %p342 = pnand %p340, %p341
      %p343 = pneg %p342
      // Predicated region
      $region45: #{tpu_custom_call.1} parent=5 // pred_check
        _
      $region46: #{tpu_custom_call.1} parent=5 // pred_check_branch
        %345 = sbr.rel (%p342) target = $region48
      $region47: #{tpu_custom_call.1} parent=5 // pred_region
        %s346 = ssub.s32 %s16, 1
        %s347 = smul.u32 16, %s26
        %s348 = smul.u32 2, %s28
        %p349 = scmp.lt.s32.totalorder %s27, 2
        %s350 = scalar_select %p349, %s27, 2
        %p351 = scmp.lt.s32.totalorder %s347, 31
        %s352 = scalar_select %p351, %s347, 31
        %p353 = scmp.lt.s32.totalorder %s348, 1
        %s354 = scalar_select %p353, %s348, 1
        %s355 = smul.addr %s352, 2
        %s356 = sadd.s32 %s354, %s355
        %s357 = smul.addr %s350, 64
        %s358 = sadd.s32 %s356, %s357
        %s359 = smul.addr %s358, 4
        %s360 = scalar_lea.vmem %s0, %s359
        %p361 = pneg %p65
        %p362 = pneg %p62
        %s363 = smul.u32 16, %s26
        %p364 = scmp.lt.s32.totalorder %s363, 31
        %s365 = scalar_select %p364, %s363, 31
        %s366 = smul.addr %s365, 4
        %s367 = scalar_lea.vmem %s1, %s366
        %p368 = pneg %p91
        %p369 = pneg %p88
        %s370 = smul.u32 32, %s28
        %p371 = scmp.lt.s32.totalorder %s370, 31
        %s372 = scalar_select %p371, %s370, 31
        %s373 = smul.addr %s372, 4
        %s374 = scalar_lea.vmem %s2, %s373
        %p375 = pneg %p117
        %p376 = pneg %p114
        %s377 = smul.u32 16, %s26
        %p378 = scmp.lt.s32.totalorder %s27, 2
        %s379 = scalar_select %p378, %s27, 2
        %p380 = scmp.lt.s32.totalorder %s377, 31
        %s381 = scalar_select %p380, %s377, 31
        %s382 = smul.addr %s379, 32
        %s383 = sadd.s32 %s381, %s382
        %s384 = smul.addr %s383, 8
        %s385 = scalar_lea.vmem %s3, %s384
        %p386 = pneg %p145
        %p387 = pneg %p142
        %p388 = scmp.lt.s32.totalorder %s27, 2
        %s389 = scalar_select %p388, %s27, 2
        %s390 = smul.addr %s389, 4
        %s391 = smul.addr %s390, 4
        %s392 = scalar_lea.vmem %s4, %s391
        %p393 = pneg %p171
        %p394 = pneg %p168
        %p395 = scmp.lt.s32.totalorder %s27, 2
        %s396 = scalar_select %p395, %s27, 2
        %s397 = smul.addr %s396, 4
        %s398 = smul.addr %s397, 4
        %s399 = scalar_lea.vmem %s5, %s398
        %p400 = pneg %p197
        %p401 = pneg %p194
        %p402 = scmp.lt.s32.totalorder %s27, 2
        %s403 = scalar_select %p402, %s27, 2
        %s404 = scalar_lea.vmem %s6, %s403
        %p405 = pneg %p223
        %p406 = pneg %p220
        %p407 = pneg %p249
        %p408 = pneg %p246
        %s409 = sand.u32 %s236, 1
        %s410 = scalar_lea.sflag [#allocation5], %s409
        %s411 = sand.u32 %s236, 1
        %s412 = smul.addr %s411, 128
        %s413 = scalar_lea.vmem [#allocation4], %s412
        %s414 = smul.u32 16, %s26
        %s415 = smul.u32 2, %s28
        %p416 = scmp.lt.s32.totalorder %s27, 2
        %s417 = scalar_select %p416, %s27, 2
        %p418 = scmp.lt.s32.totalorder %s414, 31
        %s419 = scalar_select %p418, %s414, 31
        %p420 = scmp.lt.s32.totalorder %s415, 1
        %s421 = scalar_select %p420, %s415, 1
        %s422 = smul.addr %s419, 2
        %s423 = sadd.s32 %s421, %s422
        %s424 = smul.addr %s417, 64
        %s425 = sadd.s32 %s423, %s424
        %s426 = smul.addr %s425, 4
        %s427 = scalar_lea.vmem %s0, %s426
        %s428 = smul.u32 16, %s26
        %s429 = smul.u32 2, %s28
        %s430 = smul.u32 16, %s26
        %p431 = scmp.lt.s32.totalorder %s430, 31
        %s432 = scalar_select %p431, %s430, 31
        %s433 = smul.addr %s432, 4
        %s434 = scalar_lea.vmem %s1, %s433
        %s435 = smul.u32 16, %s26
        %s436 = smul.u32 32, %s28
        %p437 = scmp.lt.s32.totalorder %s436, 31
        %s438 = scalar_select %p437, %s436, 31
        %s439 = smul.addr %s438, 4
        %s440 = scalar_lea.vmem %s2, %s439
        %s441 = smul.u32 32, %s28
        %s442 = smul.u32 16, %s26
        %p443 = scmp.lt.s32.totalorder %s27, 2
        %s444 = scalar_select %p443, %s27, 2
        %p445 = scmp.lt.s32.totalorder %s442, 31
        %s446 = scalar_select %p445, %s442, 31
        %s447 = smul.addr %s444, 32
        %s448 = sadd.s32 %s446, %s447
        %s449 = smul.addr %s448, 8
        %s450 = scalar_lea.vmem %s3, %s449
        %s451 = smul.u32 16, %s26
        %p452 = scmp.lt.s32.totalorder %s27, 2
        %s453 = scalar_select %p452, %s27, 2
        %s454 = smul.addr %s453, 4
        %s455 = smul.addr %s454, 4
        %s456 = scalar_lea.vmem %s4, %s455
        %p457 = scmp.lt.s32.totalorder %s27, 2
        %s458 = scalar_select %p457, %s27, 2
        %s459 = smul.addr %s458, 4
        %s460 = smul.addr %s459, 4
        %s461 = scalar_lea.vmem %s5, %s460
        %p462 = scmp.lt.s32.totalorder %s27, 2
        %s463 = scalar_select %p462, %s27, 2
        %s464 = scalar_lea.vmem %s6, %s463
        %s465 = smul.u32 16, %s26
        %p467 = scmp.eq.s32.totalorder %s27, 0
        %p468 = scmp.eq.s32.totalorder %s28, 0
        %p469 = pnand %p467, %p468
        %p470 = pneg %p469
        // Predicated region
        $region49: #{tpu_custom_call.1} parent=47 // pred_check
          _
        $region50: #{tpu_custom_call.1} parent=47 // pred_check_branch
          %472 = sbr.rel (%p469) target = $region52
        $region51: #{tpu_custom_call.1} parent=47 // pred_region
          %473 = vst [vmem:[#allocation2] sm:$0xff] 0.0
          %474 = vst [vmem:[#allocation2 + $0x8] sm:$0xff] 0.0
          %475 = vst [vmem:[#allocation2 + $0x10] sm:$0xff] 0.0
          %476 = vst [vmem:[#allocation2 + $0x18] sm:$0xff] 0.0
          %477 = vst [vmem:[#allocation2 + $0x20] sm:$0xff] 0.0
          %478 = vst [vmem:[#allocation2 + $0x28] sm:$0xff] 0.0
          %479 = vst [vmem:[#allocation2 + $0x30] sm:$0xff] 0.0
          %480 = vst [vmem:[#allocation2 + $0x38] sm:$0xff] 0.0
          %481 = vst [vmem:[#allocation2 + $0x40] sm:$0xff] 0.0
          %482 = vst [vmem:[#allocation2 + $0x48] sm:$0xff] 0.0
          %483 = vst [vmem:[#allocation2 + $0x50] sm:$0xff] 0.0
          %484 = vst [vmem:[#allocation2 + $0x58] sm:$0xff] 0.0
          %485 = vst [vmem:[#allocation2 + $0x60] sm:$0xff] 0.0
          %486 = vst [vmem:[#allocation2 + $0x68] sm:$0xff] 0.0
          %487 = vst [vmem:[#allocation2 + $0x70] sm:$0xff] 0.0
          %488 = vst [vmem:[#allocation2 + $0x78] sm:$0xff] 0.0
        $region52: #{tpu_custom_call.1} parent=47 // pred_fallthru
          _
        // Predicated region
        $region53: #{tpu_custom_call.1} parent=47 // pred_check
          %p489 = pneg %p468
        $region54: #{tpu_custom_call.1} parent=47 // pred_check_branch
          %491 = sbr.rel (%p489) target = $region56
        $region55: #{tpu_custom_call.1} parent=47 // pred_region
          %vm492 = vcmask 261120
          %493 = vst.msk [vmem:[#allocation3] sm:$0xff] %vm492, 0.0
          %494 = vst.msk [vmem:[#allocation3 + $0x8] sm:$0xff] %vm492, 0.0
          %495 = vst.msk [vmem:[#allocation3 + $0x10] sm:$0xff] %vm492, 0.0
          %496 = vst.msk [vmem:[#allocation3 + $0x18] sm:$0xff] %vm492, 0.0
          %497 = vst.msk [vmem:[#allocation3 + $0x20] sm:$0xff] %vm492, 0.0
          %498 = vst.msk [vmem:[#allocation3 + $0x28] sm:$0xff] %vm492, 0.0
          %499 = vst.msk [vmem:[#allocation3 + $0x30] sm:$0xff] %vm492, 0.0
          %500 = vst.msk [vmem:[#allocation3 + $0x38] sm:$0xff] %vm492, 0.0
          %501 = vst.msk [vmem:[#allocation3 + $0x40] sm:$0xff] %vm492, 0.0
          %502 = vst.msk [vmem:[#allocation3 + $0x48] sm:$0xff] %vm492, 0.0
          %503 = vst.msk [vmem:[#allocation3 + $0x50] sm:$0xff] %vm492, 0.0
          %504 = vst.msk [vmem:[#allocation3 + $0x58] sm:$0xff] %vm492, 0.0
          %505 = vst.msk [vmem:[#allocation3 + $0x60] sm:$0xff] %vm492, 0.0
          %506 = vst.msk [vmem:[#allocation3 + $0x68] sm:$0xff] %vm492, 0.0
          %507 = vst.msk [vmem:[#allocation3 + $0x70] sm:$0xff] %vm492, 0.0
          %508 = vst.msk [vmem:[#allocation3 + $0x78] sm:$0xff] %vm492, 0.0
        $region56: #{tpu_custom_call.1} parent=47 // pred_fallthru
          _
        %v509 = vld [vmem:[#allocation3] sm:$0xff]
        %v510 = vld [vmem:[#allocation3 + $0x8] sm:$0xff]
        %v511 = vld [vmem:[#allocation3 + $0x10] sm:$0xff]
        %v512 = vld [vmem:[#allocation3 + $0x18] sm:$0xff]
        %v513 = vld [vmem:[#allocation3 + $0x20] sm:$0xff]
        %v514 = vld [vmem:[#allocation3 + $0x28] sm:$0xff]
        %v515 = vld [vmem:[#allocation3 + $0x30] sm:$0xff]
        %v516 = vld [vmem:[#allocation3 + $0x38] sm:$0xff]
        %v517 = vld [vmem:[#allocation3 + $0x40] sm:$0xff]
        %v518 = vld [vmem:[#allocation3 + $0x48] sm:$0xff]
        %v519 = vld [vmem:[#allocation3 + $0x50] sm:$0xff]
        %v520 = vld [vmem:[#allocation3 + $0x58] sm:$0xff]
        %v521 = vld [vmem:[#allocation3 + $0x60] sm:$0xff]
        %v522 = vld [vmem:[#allocation3 + $0x68] sm:$0xff]
        %v523 = vld [vmem:[#allocation3 + $0x70] sm:$0xff]
        %v524 = vld [vmem:[#allocation3 + $0x78] sm:$0xff]
        %v525 = vld [vmem:[%s427] sm:$0xff]
        %v526 = vld [vmem:[%s427 + $0x8] sm:$0xff]
        %v527 = vld [vmem:[%s427 + $0x10] sm:$0xff]
        %v528 = vld [vmem:[%s427 + $0x18] sm:$0xff]
        %v529 = vld [vmem:[%s427 + $0x20] sm:$0xff]
        %v530 = vld [vmem:[%s427 + $0x28] sm:$0xff]
        %v531 = vld [vmem:[%s427 + $0x30] sm:$0xff]
        %v532 = vld [vmem:[%s427 + $0x38] sm:$0xff]
        %v533 = vld [vmem:[%s427 + $0x40] sm:$0xff]
        %v534 = vld [vmem:[%s427 + $0x48] sm:$0xff]
        %v535 = vld [vmem:[%s427 + $0x50] sm:$0xff]
        %v536 = vld [vmem:[%s427 + $0x58] sm:$0xff]
        %v537 = vld [vmem:[%s427 + $0x60] sm:$0xff]
        %v538 = vld [vmem:[%s427 + $0x68] sm:$0xff]
        %v539 = vld [vmem:[%s427 + $0x70] sm:$0xff]
        %v540 = vld [vmem:[%s427 + $0x78] sm:$0xff]
        %v541 = vld [vmem:[%s440] sm:$0xf]
        %v542 = vld [vmem:[%s440 + $0x4] sm:$0xf]
        %v543 = vld [vmem:[%s440 + $0x8] sm:$0xf]
        %v544 = vld [vmem:[%s440 + $0xc] sm:$0xf]
        %v545 = vld [vmem:[%s440 + $0x10] sm:$0xf]
        %v546 = vld [vmem:[%s440 + $0x14] sm:$0xf]
        %v547 = vld [vmem:[%s440 + $0x18] sm:$0xf]
        %v548 = vld [vmem:[%s440 + $0x1c] sm:$0xf]
        %v549 = vld [vmem:[%s440 + $0x20] sm:$0xf]
        %v550 = vld [vmem:[%s440 + $0x24] sm:$0xf]
        %v551 = vld [vmem:[%s440 + $0x28] sm:$0xf]
        %v552 = vld [vmem:[%s440 + $0x2c] sm:$0xf]
        %v553 = vld [vmem:[%s440 + $0x30] sm:$0xf]
        %v554 = vld [vmem:[%s440 + $0x34] sm:$0xf]
        %v555 = vld [vmem:[%s440 + $0x38] sm:$0xf]
        %v556 = vld [vmem:[%s440 + $0x3c] sm:$0xf]
        %v557 = vld [vmem:[%s440 + $0x40] sm:$0xf]
        %v558 = vld [vmem:[%s440 + $0x44] sm:$0xf]
        %v559 = vld [vmem:[%s440 + $0x48] sm:$0xf]
        %v560 = vld [vmem:[%s440 + $0x4c] sm:$0xf]
        %v561 = vld [vmem:[%s440 + $0x50] sm:$0xf]
        %v562 = vld [vmem:[%s440 + $0x54] sm:$0xf]
        %v563 = vld [vmem:[%s440 + $0x58] sm:$0xf]
        %v564 = vld [vmem:[%s440 + $0x5c] sm:$0xf]
        %v565 = vld [vmem:[%s440 + $0x60] sm:$0xf]
        %v566 = vld [vmem:[%s440 + $0x64] sm:$0xf]
        %v567 = vld [vmem:[%s440 + $0x68] sm:$0xf]
        %v568 = vld [vmem:[%s440 + $0x6c] sm:$0xf]
        %v569 = vld [vmem:[%s440 + $0x70] sm:$0xf]
        %v570 = vld [vmem:[%s440 + $0x74] sm:$0xf]
        %v571 = vld [vmem:[%s440 + $0x78] sm:$0xf]
        %v572 = vld [vmem:[%s440 + $0x7c] sm:$0xf]
        %v589 = vunpack.c.l.b16 %v525
        %v590 = vunpack.c.h.b16 %v525
        %v591 = vunpack.c.l.b16 %v526
        %v592 = vunpack.c.h.b16 %v526
        %v593 = vunpack.c.l.b16 %v527
        %v594 = vunpack.c.h.b16 %v527
        %v595 = vunpack.c.l.b16 %v528
        %v596 = vunpack.c.h.b16 %v528
        %v597 = vunpack.c.l.b16 %v529
        %v598 = vunpack.c.h.b16 %v529
        %v599 = vunpack.c.l.b16 %v530
        %v600 = vunpack.c.h.b16 %v530
        %v601 = vunpack.c.l.b16 %v531
        %v602 = vunpack.c.h.b16 %v531
        %v603 = vunpack.c.l.b16 %v532
        %v604 = vunpack.c.h.b16 %v532
        %v605 = vunpack.c.l.b16 %v533
        %v606 = vunpack.c.h.b16 %v533
        %v607 = vunpack.c.l.b16 %v534
        %v608 = vunpack.c.h.b16 %v534
        %v609 = vunpack.c.l.b16 %v535
        %v610 = vunpack.c.h.b16 %v535
        %v611 = vunpack.c.l.b16 %v536
        %v612 = vunpack.c.h.b16 %v536
        %v613 = vunpack.c.l.b16 %v537
        %v614 = vunpack.c.h.b16 %v537
        %v615 = vunpack.c.l.b16 %v538
        %v616 = vunpack.c.h.b16 %v538
        %v617 = vunpack.c.l.b16 %v539
        %v618 = vunpack.c.h.b16 %v539
        %v619 = vunpack.c.l.b16 %v540
        %v620 = vunpack.c.h.b16 %v540
        %v621 = vpack.c.b16 %v591, %v589
        %v622 = vpack.c.b16 %v592, %v590
        %v623 = vpack.c.b16 %v595, %v593
        %v624 = vpack.c.b16 %v596, %v594
        %v625 = vpack.c.b16 %v599, %v597
        %v626 = vpack.c.b16 %v600, %v598
        %v627 = vpack.c.b16 %v603, %v601
        %v628 = vpack.c.b16 %v604, %v602
        %v629 = vpack.c.b16 %v607, %v605
        %v630 = vpack.c.b16 %v608, %v606
        %v631 = vpack.c.b16 %v611, %v609
        %v632 = vpack.c.b16 %v612, %v610
        %v633 = vpack.c.b16 %v615, %v613
        %v634 = vpack.c.b16 %v616, %v614
        %v635 = vpack.c.b16 %v619, %v617
        %v636 = vpack.c.b16 %v620, %v618
        %v685 = vunpack.c.l.b16 %v541
        %v686 = vunpack.c.l.b16 %v542
        %v687 = vunpack.c.l.b16 %v543
        %v688 = vunpack.c.l.b16 %v544
        %v689 = vunpack.c.l.b16 %v545
        %v690 = vunpack.c.l.b16 %v546
        %v691 = vunpack.c.l.b16 %v547
        %v692 = vunpack.c.l.b16 %v548
        %v693 = vunpack.c.l.b16 %v549
        %v694 = vunpack.c.l.b16 %v550
        %v695 = vunpack.c.l.b16 %v551
        %v696 = vunpack.c.l.b16 %v552
        %v697 = vunpack.c.l.b16 %v553
        %v698 = vunpack.c.l.b16 %v554
        %v699 = vunpack.c.l.b16 %v555
        %v700 = vunpack.c.l.b16 %v556
        %v701 = vunpack.c.l.b16 %v557
        %v702 = vunpack.c.l.b16 %v558
        %v703 = vunpack.c.l.b16 %v559
        %v704 = vunpack.c.l.b16 %v560
        %v705 = vunpack.c.l.b16 %v561
        %v706 = vunpack.c.l.b16 %v562
        %v707 = vunpack.c.l.b16 %v563
        %v708 = vunpack.c.l.b16 %v564
        %v709 = vunpack.c.l.b16 %v565
        %v710 = vunpack.c.l.b16 %v566
        %v711 = vunpack.c.l.b16 %v567
        %v712 = vunpack.c.l.b16 %v568
        %v713 = vunpack.c.l.b16 %v569
        %v714 = vunpack.c.l.b16 %v570
        %v715 = vunpack.c.l.b16 %v571
        %v716 = vunpack.c.l.b16 %v572
        %v717 = vpack.c.b16 %v686, %v685
        %v718 = vpack.c.b16 %v688, %v687
        %v719 = vpack.c.b16 %v690, %v689
        %v720 = vpack.c.b16 %v692, %v691
        %v721 = vpack.c.b16 %v694, %v693
        %v722 = vpack.c.b16 %v696, %v695
        %v723 = vpack.c.b16 %v698, %v697
        %v724 = vpack.c.b16 %v700, %v699
        %v725 = vpack.c.b16 %v702, %v701
        %v726 = vpack.c.b16 %v704, %v703
        %v727 = vpack.c.b16 %v706, %v705
        %v728 = vpack.c.b16 %v708, %v707
        %v729 = vpack.c.b16 %v710, %v709
        %v730 = vpack.c.b16 %v712, %v711
        %v731 = vpack.c.b16 %v714, %v713
        %v732 = vpack.c.b16 %v716, %v715
        %749 = vmatpush.bf16.msra.mxu0 %v724
        %750 = vmatpush.bf16.msra.mxu0 %v723
        %751 = vmatpush.bf16.msra.mxu0 %v722
        %752 = vmatpush.bf16.msra.mxu0 %v721
        %753 = vmatpush.bf16.msra.mxu0 %v720
        %754 = vmatpush.bf16.msra.mxu0 %v719
        %755 = vmatpush.bf16.msra.mxu0 %v718
        %756 = vmatpush.bf16.msra.mxu0 %v717
        %757 = vmatmul.bf16.gmra.mxu0 %v621
        %v758 = vpop.f32.mrf.mxu0
        %v759 = vadd.f32 0.0, %v758
        %v760 = vpop.f32.mrf.mxu0
        %v761 = vadd.f32 0.0, %v760
        %762 = vmatmul.bf16.gmra.mxu0 %v623
        %v763 = vpop.f32.mrf.mxu0
        %v764 = vadd.f32 0.0, %v763
        %v765 = vpop.f32.mrf.mxu0
        %v766 = vadd.f32 0.0, %v765
        %767 = vmatmul.bf16.gmra.mxu0 %v625
        %v768 = vpop.f32.mrf.mxu0
        %v769 = vadd.f32 0.0, %v768
        %v770 = vpop.f32.mrf.mxu0
        %v771 = vadd.f32 0.0, %v770
        %772 = vmatmul.bf16.gmra.mxu0 %v627
        %v773 = vpop.f32.mrf.mxu0
        %v774 = vadd.f32 0.0, %v773
        %v775 = vpop.f32.mrf.mxu0
        %v776 = vadd.f32 0.0, %v775
        %777 = vmatmul.bf16.gmra.mxu0 %v629
        %v778 = vpop.f32.mrf.mxu0
        %v779 = vadd.f32 0.0, %v778
        %v780 = vpop.f32.mrf.mxu0
        %v781 = vadd.f32 0.0, %v780
        %782 = vmatmul.bf16.gmra.mxu0 %v631
        %v783 = vpop.f32.mrf.mxu0
        %v784 = vadd.f32 0.0, %v783
        %v785 = vpop.f32.mrf.mxu0
        %v786 = vadd.f32 0.0, %v785
        %787 = vmatmul.bf16.gmra.mxu0 %v633
        %v788 = vpop.f32.mrf.mxu0
        %v789 = vadd.f32 0.0, %v788
        %v790 = vpop.f32.mrf.mxu0
        %v791 = vadd.f32 0.0, %v790
        %792 = vmatmul.bf16.gmra.mxu0 %v635
        %v793 = vpop.f32.mrf.mxu0
        %v794 = vadd.f32 0.0, %v793
        %v795 = vpop.f32.mrf.mxu0
        %v796 = vadd.f32 0.0, %v795
        %797 = vdwg.mxu0
        %798 = vmatpush.bf16.msra.mxu0 %v732
        %799 = vmatpush.bf16.msra.mxu0 %v731
        %800 = vmatpush.bf16.msra.mxu0 %v730
        %801 = vmatpush.bf16.msra.mxu0 %v729
        %802 = vmatpush.bf16.msra.mxu0 %v728
        %803 = vmatpush.bf16.msra.mxu0 %v727
        %804 = vmatpush.bf16.msra.mxu0 %v726
        %805 = vmatpush.bf16.msra.mxu0 %v725
        %806 = vmatmul.bf16.gmra.mxu0 %v622
        %v807 = vpop.f32.mrf.mxu0
        %v808 = vadd.f32 %v759, %v807
        %v809 = vpop.f32.mrf.mxu0
        %v810 = vadd.f32 %v761, %v809
        %811 = vmatmul.bf16.gmra.mxu0 %v624
        %v812 = vpop.f32.mrf.mxu0
        %v813 = vadd.f32 %v764, %v812
        %v814 = vpop.f32.mrf.mxu0
        %v815 = vadd.f32 %v766, %v814
        %816 = vmatmul.bf16.gmra.mxu0 %v626
        %v817 = vpop.f32.mrf.mxu0
        %v818 = vadd.f32 %v769, %v817
        %v819 = vpop.f32.mrf.mxu0
        %v820 = vadd.f32 %v771, %v819
        %821 = vmatmul.bf16.gmra.mxu0 %v628
        %v822 = vpop.f32.mrf.mxu0
        %v823 = vadd.f32 %v774, %v822
        %v824 = vpop.f32.mrf.mxu0
        %v825 = vadd.f32 %v776, %v824
        %826 = vmatmul.bf16.gmra.mxu0 %v630
        %v827 = vpop.f32.mrf.mxu0
        %v828 = vadd.f32 %v779, %v827
        %v829 = vpop.f32.mrf.mxu0
        %v830 = vadd.f32 %v781, %v829
        %831 = vmatmul.bf16.gmra.mxu0 %v632
        %v832 = vpop.f32.mrf.mxu0
        %v833 = vadd.f32 %v784, %v832
        %v834 = vpop.f32.mrf.mxu0
        %v835 = vadd.f32 %v786, %v834
        %836 = vmatmul.bf16.gmra.mxu0 %v634
        %v837 = vpop.f32.mrf.mxu0
        %v838 = vadd.f32 %v789, %v837
        %v839 = vpop.f32.mrf.mxu0
        %v840 = vadd.f32 %v791, %v839
        %841 = vmatmul.bf16.gmra.mxu0 %v636
        %v842 = vpop.f32.mrf.mxu0
        %v843 = vadd.f32 %v794, %v842
        %v844 = vpop.f32.mrf.mxu0
        %v845 = vadd.f32 %v796, %v844
        %846 = vdwg.mxu0
        %v847 = vadd.f32 %v509, %v808
        %v848 = vadd.f32 %v510, %v810
        %v849 = vadd.f32 %v511, %v813
        %v850 = vadd.f32 %v512, %v815
        %v851 = vadd.f32 %v513, %v818
        %v852 = vadd.f32 %v514, %v820
        %v853 = vadd.f32 %v515, %v823
        %v854 = vadd.f32 %v516, %v825
        %v855 = vadd.f32 %v517, %v828
        %v856 = vadd.f32 %v518, %v830
        %v857 = vadd.f32 %v519, %v833
        %v858 = vadd.f32 %v520, %v835
        %v859 = vadd.f32 %v521, %v838
        %v860 = vadd.f32 %v522, %v840
        %v861 = vadd.f32 %v523, %v843
        %v862 = vadd.f32 %v524, %v845
        %vm863 = vcmask 261120
        %864 = vst.msk [vmem:[#allocation3] sm:$0xff] %vm863, %v847
        %865 = vst.msk [vmem:[#allocation3 + $0x8] sm:$0xff] %vm863, %v848
        %866 = vst.msk [vmem:[#allocation3 + $0x10] sm:$0xff] %vm863, %v849
        %867 = vst.msk [vmem:[#allocation3 + $0x18] sm:$0xff] %vm863, %v850
        %868 = vst.msk [vmem:[#allocation3 + $0x20] sm:$0xff] %vm863, %v851
        %869 = vst.msk [vmem:[#allocation3 + $0x28] sm:$0xff] %vm863, %v852
        %870 = vst.msk [vmem:[#allocation3 + $0x30] sm:$0xff] %vm863, %v853
        %871 = vst.msk [vmem:[#allocation3 + $0x38] sm:$0xff] %vm863, %v854
        %872 = vst.msk [vmem:[#allocation3 + $0x40] sm:$0xff] %vm863, %v855
        %873 = vst.msk [vmem:[#allocation3 + $0x48] sm:$0xff] %vm863, %v856
        %874 = vst.msk [vmem:[#allocation3 + $0x50] sm:$0xff] %vm863, %v857
        %875 = vst.msk [vmem:[#allocation3 + $0x58] sm:$0xff] %vm863, %v858
        %876 = vst.msk [vmem:[#allocation3 + $0x60] sm:$0xff] %vm863, %v859
        %877 = vst.msk [vmem:[#allocation3 + $0x68] sm:$0xff] %vm863, %v860
        %878 = vst.msk [vmem:[#allocation3 + $0x70] sm:$0xff] %vm863, %v861
        %879 = vst.msk [vmem:[#allocation3 + $0x78] sm:$0xff] %vm863, %v862
        // Predicated region
        $region57: #{tpu_custom_call.1} parent=47 // pred_check
          %p880 = pneg %p468
        $region58: #{tpu_custom_call.1} parent=47 // pred_check_branch
          %882 = sbr.rel (%p880) target = $region60
        $region59: #{tpu_custom_call.1} parent=47 // pred_region
          %v883 = vld [vmem:[#allocation3] sm:$0xff]
          %v884 = vld [vmem:[#allocation3 + $0x8] sm:$0xff]
          %v885 = vld [vmem:[#allocation3 + $0x10] sm:$0xff]
          %v886 = vld [vmem:[#allocation3 + $0x18] sm:$0xff]
          %v887 = vld [vmem:[#allocation3 + $0x20] sm:$0xff]
          %v888 = vld [vmem:[#allocation3 + $0x28] sm:$0xff]
          %v889 = vld [vmem:[#allocation3 + $0x30] sm:$0xff]
          %v890 = vld [vmem:[#allocation3 + $0x38] sm:$0xff]
          %v891 = vld [vmem:[#allocation3 + $0x40] sm:$0xff]
          %v892 = vld [vmem:[#allocation3 + $0x48] sm:$0xff]
          %v893 = vld [vmem:[#allocation3 + $0x50] sm:$0xff]
          %v894 = vld [vmem:[#allocation3 + $0x58] sm:$0xff]
          %v895 = vld [vmem:[#allocation3 + $0x60] sm:$0xff]
          %v896 = vld [vmem:[#allocation3 + $0x68] sm:$0xff]
          %v897 = vld [vmem:[#allocation3 + $0x70] sm:$0xff]
          %v898 = vld [vmem:[#allocation3 + $0x78] sm:$0xff]
          %v899 = vld [vmem:[%s450] sm:$0xff]
          %v900 = vld [vmem:[%s450 + $0x8] sm:$0xff]
          %v901 = vld [vmem:[%s450 + $0x10] sm:$0xff]
          %v902 = vld [vmem:[%s450 + $0x18] sm:$0xff]
          %v903 = vld [vmem:[%s450 + $0x20] sm:$0xff]
          %v904 = vld [vmem:[%s450 + $0x28] sm:$0xff]
          %v905 = vld [vmem:[%s450 + $0x30] sm:$0xff]
          %v906 = vld [vmem:[%s450 + $0x38] sm:$0xff]
          %v907 = vld [vmem:[%s450 + $0x40] sm:$0xff]
          %v908 = vld [vmem:[%s450 + $0x48] sm:$0xff]
          %v909 = vld [vmem:[%s450 + $0x50] sm:$0xff]
          %v910 = vld [vmem:[%s450 + $0x58] sm:$0xff]
          %v911 = vld [vmem:[%s450 + $0x60] sm:$0xff]
          %v912 = vld [vmem:[%s450 + $0x68] sm:$0xff]
          %v913 = vld [vmem:[%s450 + $0x70] sm:$0xff]
          %v914 = vld [vmem:[%s450 + $0x78] sm:$0xff]
          %916 = vset.pattern.permute.xlu0 0
          %917 = vperm.xlu0 %916, %v899
          %v918 = vpop.permute.xlu0 %917
          %921 = vset.pattern.permute.xlu0 0
          %922 = vperm.xlu0 %921, %v900
          %v923 = vpop.permute.xlu0 %922
          %926 = vset.pattern.permute.xlu0 0
          %927 = vperm.xlu0 %926, %v901
          %v928 = vpop.permute.xlu0 %927
          %931 = vset.pattern.permute.xlu0 0
          %932 = vperm.xlu0 %931, %v902
          %v933 = vpop.permute.xlu0 %932
          %936 = vset.pattern.permute.xlu0 0
          %937 = vperm.xlu0 %936, %v903
          %v938 = vpop.permute.xlu0 %937
          %941 = vset.pattern.permute.xlu0 0
          %942 = vperm.xlu0 %941, %v904
          %v943 = vpop.permute.xlu0 %942
          %946 = vset.pattern.permute.xlu0 0
          %947 = vperm.xlu0 %946, %v905
          %v948 = vpop.permute.xlu0 %947
          %951 = vset.pattern.permute.xlu0 0
          %952 = vperm.xlu0 %951, %v906
          %v953 = vpop.permute.xlu0 %952
          %956 = vset.pattern.permute.xlu0 0
          %957 = vperm.xlu0 %956, %v907
          %v958 = vpop.permute.xlu0 %957
          %961 = vset.pattern.permute.xlu0 0
          %962 = vperm.xlu0 %961, %v908
          %v963 = vpop.permute.xlu0 %962
          %966 = vset.pattern.permute.xlu0 0
          %967 = vperm.xlu0 %966, %v909
          %v968 = vpop.permute.xlu0 %967
          %971 = vset.pattern.permute.xlu0 0
          %972 = vperm.xlu0 %971, %v910
          %v973 = vpop.permute.xlu0 %972
          %976 = vset.pattern.permute.xlu0 0
          %977 = vperm.xlu0 %976, %v911
          %v978 = vpop.permute.xlu0 %977
          %981 = vset.pattern.permute.xlu0 0
          %982 = vperm.xlu0 %981, %v912
          %v983 = vpop.permute.xlu0 %982
          %986 = vset.pattern.permute.xlu0 0
          %987 = vperm.xlu0 %986, %v913
          %v988 = vpop.permute.xlu0 %987
          %991 = vset.pattern.permute.xlu0 0
          %992 = vperm.xlu0 %991, %v914
          %v993 = vpop.permute.xlu0 %992
          %v995 = vmul.f32 %v883, %v918
          %v996 = vmul.f32 %v884, %v923
          %v997 = vmul.f32 %v885, %v928
          %v998 = vmul.f32 %v886, %v933
          %v999 = vmul.f32 %v887, %v938
          %v1000 = vmul.f32 %v888, %v943
          %v1001 = vmul.f32 %v889, %v948
          %v1002 = vmul.f32 %v890, %v953
          %v1003 = vmul.f32 %v891, %v958
          %v1004 = vmul.f32 %v892, %v963
          %v1005 = vmul.f32 %v893, %v968
          %v1006 = vmul.f32 %v894, %v973
          %v1007 = vmul.f32 %v895, %v978
          %v1008 = vmul.f32 %v896, %v983
          %v1009 = vmul.f32 %v897, %v988
          %v1010 = vmul.f32 %v898, %v993
          %v1011 = vld [vmem:[%s434] sm:$0xf]
          %v1012 = vld [vmem:[%s434 + $0x4] sm:$0xf]
          %v1013 = vld [vmem:[%s434 + $0x8] sm:$0xf]
          %v1014 = vld [vmem:[%s434 + $0xc] sm:$0xf]
          %v1015 = vld [vmem:[%s434 + $0x10] sm:$0xf]
          %v1016 = vld [vmem:[%s434 + $0x14] sm:$0xf]
          %v1017 = vld [vmem:[%s434 + $0x18] sm:$0xf]
          %v1018 = vld [vmem:[%s434 + $0x1c] sm:$0xf]
          %v1019 = vld [vmem:[%s434 + $0x20] sm:$0xf]
          %v1020 = vld [vmem:[%s434 + $0x24] sm:$0xf]
          %v1021 = vld [vmem:[%s434 + $0x28] sm:$0xf]
          %v1022 = vld [vmem:[%s434 + $0x2c] sm:$0xf]
          %v1023 = vld [vmem:[%s434 + $0x30] sm:$0xf]
          %v1024 = vld [vmem:[%s434 + $0x34] sm:$0xf]
          %v1025 = vld [vmem:[%s434 + $0x38] sm:$0xf]
          %v1026 = vld [vmem:[%s434 + $0x3c] sm:$0xf]
          %v1027 = vld [vmem:[%s456] sm:$0xf]
          %v1028 = vld [vmem:[%s456 + $0x4] sm:$0xf]
          %v1029 = vld [vmem:[%s456 + $0x8] sm:$0xf]
          %v1030 = vld [vmem:[%s456 + $0xc] sm:$0xf]
          %v1031 = vpack.c.bf16 %v996, %v995
          %v1032 = vpack.c.bf16 %v998, %v997
          %v1033 = vpack.c.bf16 %v1000, %v999
          %v1034 = vpack.c.bf16 %v1002, %v1001
          %v1035 = vpack.c.bf16 %v1004, %v1003
          %v1036 = vpack.c.bf16 %v1006, %v1005
          %v1037 = vpack.c.bf16 %v1008, %v1007
          %v1038 = vpack.c.bf16 %v1010, %v1009
          %v1039 = vld [vmem:[%s461] sm:$0xf]
          %v1040 = vld [vmem:[%s461 + $0x4] sm:$0xf]
          %v1041 = vld [vmem:[%s461 + $0x8] sm:$0xf]
          %v1042 = vld [vmem:[%s461 + $0xc] sm:$0xf]
          %v1047 = vunpack.c.l.b16 %v1039
          %v1048 = vunpack.c.l.b16 %v1040
          %v1049 = vunpack.c.l.b16 %v1041
          %v1050 = vunpack.c.l.b16 %v1042
          %v1051 = vpack.c.b16 %v1048, %v1047
          %v1052 = vpack.c.b16 %v1050, %v1049
          %v1056 = vsel %vm863, %v1031, 0
          %v1059 = vsel %vm863, %v1032, 0
          %v1062 = vsel %vm863, %v1033, 0
          %v1065 = vsel %vm863, %v1034, 0
          %v1068 = vsel %vm863, %v1035, 0
          %v1071 = vsel %vm863, %v1036, 0
          %v1074 = vsel %vm863, %v1037, 0
          %v1077 = vsel %vm863, %v1038, 0
          %1079 = vmatpush.bf16.msra.mxu0 0
          %1080 = vmatpush.bf16.msra.mxu0 0
          %1081 = vmatpush.bf16.msra.mxu0 0
          %1082 = vmatpush.bf16.msra.mxu0 0
          %1083 = vmatpush.bf16.msra.mxu0 0
          %1084 = vmatpush.bf16.msra.mxu0 0
          %1085 = vmatpush.bf16.msra.mxu0 %v1052
          %1086 = vmatpush.bf16.msra.mxu0 %v1051
          %1087 = vmatmul.bf16.gmra.mxu0 %v1056
          %v1088 = vpop.f32.mrf.mxu0
          %v1089 = vadd.f32 0.0, %v1088
          %v1090 = vpop.f32.mrf.mxu0
          %v1091 = vadd.f32 0.0, %v1090
          %1092 = vmatmul.bf16.gmra.mxu0 %v1059
          %v1093 = vpop.f32.mrf.mxu0
          %v1094 = vadd.f32 0.0, %v1093
          %v1095 = vpop.f32.mrf.mxu0
          %v1096 = vadd.f32 0.0, %v1095
          %1097 = vmatmul.bf16.gmra.mxu0 %v1062
          %v1098 = vpop.f32.mrf.mxu0
          %v1099 = vadd.f32 0.0, %v1098
          %v1100 = vpop.f32.mrf.mxu0
          %v1101 = vadd.f32 0.0, %v1100
          %1102 = vmatmul.bf16.gmra.mxu0 %v1065
          %v1103 = vpop.f32.mrf.mxu0
          %v1104 = vadd.f32 0.0, %v1103
          %v1105 = vpop.f32.mrf.mxu0
          %v1106 = vadd.f32 0.0, %v1105
          %1107 = vmatmul.bf16.gmra.mxu0 %v1068
          %v1108 = vpop.f32.mrf.mxu0
          %v1109 = vadd.f32 0.0, %v1108
          %v1110 = vpop.f32.mrf.mxu0
          %v1111 = vadd.f32 0.0, %v1110
          %1112 = vmatmul.bf16.gmra.mxu0 %v1071
          %v1113 = vpop.f32.mrf.mxu0
          %v1114 = vadd.f32 0.0, %v1113
          %v1115 = vpop.f32.mrf.mxu0
          %v1116 = vadd.f32 0.0, %v1115
          %1117 = vmatmul.bf16.gmra.mxu0 %v1074
          %v1118 = vpop.f32.mrf.mxu0
          %v1119 = vadd.f32 0.0, %v1118
          %v1120 = vpop.f32.mrf.mxu0
          %v1121 = vadd.f32 0.0, %v1120
          %1122 = vmatmul.bf16.gmra.mxu0 %v1077
          %v1123 = vpop.f32.mrf.mxu0
          %v1124 = vadd.f32 0.0, %v1123
          %v1125 = vpop.f32.mrf.mxu0
          %v1126 = vadd.f32 0.0, %v1125
          %1127 = vdwg.mxu0
          %v1144 = vunpack.c.l.b16 %v1011
          %v1145 = vunpack.c.l.b16 %v1012
          %v1146 = vunpack.c.l.b16 %v1013
          %v1147 = vunpack.c.l.b16 %v1014
          %v1148 = vunpack.c.l.b16 %v1015
          %v1149 = vunpack.c.l.b16 %v1016
          %v1150 = vunpack.c.l.b16 %v1017
          %v1151 = vunpack.c.l.b16 %v1018
          %v1152 = vunpack.c.l.b16 %v1019
          %v1153 = vunpack.c.l.b16 %v1020
          %v1154 = vunpack.c.l.b16 %v1021
          %v1155 = vunpack.c.l.b16 %v1022
          %v1156 = vunpack.c.l.b16 %v1023
          %v1157 = vunpack.c.l.b16 %v1024
          %v1158 = vunpack.c.l.b16 %v1025
          %v1159 = vunpack.c.l.b16 %v1026
          %v1160 = vpack.c.b16 %v1145, %v1144
          %v1161 = vpack.c.b16 %v1147, %v1146
          %v1162 = vpack.c.b16 %v1149, %v1148
          %v1163 = vpack.c.b16 %v1151, %v1150
          %v1164 = vpack.c.b16 %v1153, %v1152
          %v1165 = vpack.c.b16 %v1155, %v1154
          %v1166 = vpack.c.b16 %v1157, %v1156
          %v1167 = vpack.c.b16 %v1159, %v1158
          %v1172 = vunpack.c.l.b16 %v1027
          %v1173 = vunpack.c.l.b16 %v1028
          %v1174 = vunpack.c.l.b16 %v1029
          %v1175 = vunpack.c.l.b16 %v1030
          %v1176 = vpack.c.b16 %v1173, %v1172
          %v1177 = vpack.c.b16 %v1175, %v1174
          %v1181 = vsel %vm863, %v1160, 0
          %v1184 = vsel %vm863, %v1161, 0
          %v1187 = vsel %vm863, %v1162, 0
          %v1190 = vsel %vm863, %v1163, 0
          %v1193 = vsel %vm863, %v1164, 0
          %v1196 = vsel %vm863, %v1165, 0
          %v1199 = vsel %vm863, %v1166, 0
          %v1202 = vsel %vm863, %v1167, 0
          %1204 = vmatpush.bf16.msra.mxu0 0
          %1205 = vmatpush.bf16.msra.mxu0 0
          %1206 = vmatpush.bf16.msra.mxu0 0
          %1207 = vmatpush.bf16.msra.mxu0 0
          %1208 = vmatpush.bf16.msra.mxu0 0
          %1209 = vmatpush.bf16.msra.mxu0 0
          %1210 = vmatpush.bf16.msra.mxu0 %v1177
          %1211 = vmatpush.bf16.msra.mxu0 %v1176
          %1212 = vmatmul.bf16.gmra.mxu0 %v1181
          %v1213 = vpop.f32.mrf.mxu0
          %v1214 = vadd.f32 %v1089, %v1213
          %v1215 = vpop.f32.mrf.mxu0
          %v1216 = vadd.f32 %v1091, %v1215
          %1217 = vmatmul.bf16.gmra.mxu0 %v1184
          %v1218 = vpop.f32.mrf.mxu0
          %v1219 = vadd.f32 %v1094, %v1218
          %v1220 = vpop.f32.mrf.mxu0
          %v1221 = vadd.f32 %v1096, %v1220
          %1222 = vmatmul.bf16.gmra.mxu0 %v1187
          %v1223 = vpop.f32.mrf.mxu0
          %v1224 = vadd.f32 %v1099, %v1223
          %v1225 = vpop.f32.mrf.mxu0
          %v1226 = vadd.f32 %v1101, %v1225
          %1227 = vmatmul.bf16.gmra.mxu0 %v1190
          %v1228 = vpop.f32.mrf.mxu0
          %v1229 = vadd.f32 %v1104, %v1228
          %v1230 = vpop.f32.mrf.mxu0
          %v1231 = vadd.f32 %v1106, %v1230
          %1232 = vmatmul.bf16.gmra.mxu0 %v1193
          %v1233 = vpop.f32.mrf.mxu0
          %v1234 = vadd.f32 %v1109, %v1233
          %v1235 = vpop.f32.mrf.mxu0
          %v1236 = vadd.f32 %v1111, %v1235
          %1237 = vmatmul.bf16.gmra.mxu0 %v1196
          %v1238 = vpop.f32.mrf.mxu0
          %v1239 = vadd.f32 %v1114, %v1238
          %v1240 = vpop.f32.mrf.mxu0
          %v1241 = vadd.f32 %v1116, %v1240
          %1242 = vmatmul.bf16.gmra.mxu0 %v1199
          %v1243 = vpop.f32.mrf.mxu0
          %v1244 = vadd.f32 %v1119, %v1243
          %v1245 = vpop.f32.mrf.mxu0
          %v1246 = vadd.f32 %v1121, %v1245
          %1247 = vmatmul.bf16.gmra.mxu0 %v1202
          %v1248 = vpop.f32.mrf.mxu0
          %v1249 = vadd.f32 %v1124, %v1248
          %v1250 = vpop.f32.mrf.mxu0
          %v1251 = vadd.f32 %v1126, %v1250
          %1252 = vdwg.mxu0
          %v1253 = vld [vmem:[%s464] sm:$0x1]
          %v1255 = vperm.slane %v1253, 0
          %v1257 = vadd.f32 %v1214, %v1255
          %v1258 = vadd.f32 %v1216, %v1255
          %v1259 = vadd.f32 %v1219, %v1255
          %v1260 = vadd.f32 %v1221, %v1255
          %v1261 = vadd.f32 %v1224, %v1255
          %v1262 = vadd.f32 %v1226, %v1255
          %v1263 = vadd.f32 %v1229, %v1255
          %v1264 = vadd.f32 %v1231, %v1255
          %v1265 = vadd.f32 %v1234, %v1255
          %v1266 = vadd.f32 %v1236, %v1255
          %v1267 = vadd.f32 %v1239, %v1255
          %v1268 = vadd.f32 %v1241, %v1255
          %v1269 = vadd.f32 %v1244, %v1255
          %v1270 = vadd.f32 %v1246, %v1255
          %v1271 = vadd.f32 %v1249, %v1255
          %v1272 = vadd.f32 %v1251, %v1255
          %v1273 = vld [vmem:[#allocation2] sm:$0xff]
          %v1274 = vld [vmem:[#allocation2 + $0x8] sm:$0xff]
          %v1275 = vld [vmem:[#allocation2 + $0x10] sm:$0xff]
          %v1276 = vld [vmem:[#allocation2 + $0x18] sm:$0xff]
          %v1277 = vld [vmem:[#allocation2 + $0x20] sm:$0xff]
          %v1278 = vld [vmem:[#allocation2 + $0x28] sm:$0xff]
          %v1279 = vld [vmem:[#allocation2 + $0x30] sm:$0xff]
          %v1280 = vld [vmem:[#allocation2 + $0x38] sm:$0xff]
          %v1281 = vld [vmem:[#allocation2 + $0x40] sm:$0xff]
          %v1282 = vld [vmem:[#allocation2 + $0x48] sm:$0xff]
          %v1283 = vld [vmem:[#allocation2 + $0x50] sm:$0xff]
          %v1284 = vld [vmem:[#allocation2 + $0x58] sm:$0xff]
          %v1285 = vld [vmem:[#allocation2 + $0x60] sm:$0xff]
          %v1286 = vld [vmem:[#allocation2 + $0x68] sm:$0xff]
          %v1287 = vld [vmem:[#allocation2 + $0x70] sm:$0xff]
          %v1288 = vld [vmem:[#allocation2 + $0x78] sm:$0xff]
          %v1289 = vmax.f32 %v1257, 0.0
          %v1290 = vmax.f32 %v1258, 0.0
          %v1291 = vmax.f32 %v1259, 0.0
          %v1292 = vmax.f32 %v1260, 0.0
          %v1293 = vmax.f32 %v1261, 0.0
          %v1294 = vmax.f32 %v1262, 0.0
          %v1295 = vmax.f32 %v1263, 0.0
          %v1296 = vmax.f32 %v1264, 0.0
          %v1297 = vmax.f32 %v1265, 0.0
          %v1298 = vmax.f32 %v1266, 0.0
          %v1299 = vmax.f32 %v1267, 0.0
          %v1300 = vmax.f32 %v1268, 0.0
          %v1301 = vmax.f32 %v1269, 0.0
          %v1302 = vmax.f32 %v1270, 0.0
          %v1303 = vmax.f32 %v1271, 0.0
          %v1304 = vmax.f32 %v1272, 0.0
          %v1305 = vadd.f32 %v1273, %v1289
          %v1306 = vadd.f32 %v1274, %v1290
          %v1307 = vadd.f32 %v1275, %v1291
          %v1308 = vadd.f32 %v1276, %v1292
          %v1309 = vadd.f32 %v1277, %v1293
          %v1310 = vadd.f32 %v1278, %v1294
          %v1311 = vadd.f32 %v1279, %v1295
          %v1312 = vadd.f32 %v1280, %v1296
          %v1313 = vadd.f32 %v1281, %v1297
          %v1314 = vadd.f32 %v1282, %v1298
          %v1315 = vadd.f32 %v1283, %v1299
          %v1316 = vadd.f32 %v1284, %v1300
          %v1317 = vadd.f32 %v1285, %v1301
          %v1318 = vadd.f32 %v1286, %v1302
          %v1319 = vadd.f32 %v1287, %v1303
          %v1320 = vadd.f32 %v1288, %v1304
          %1321 = vst [vmem:[#allocation2] sm:$0xff] %v1305
          %1322 = vst [vmem:[#allocation2 + $0x8] sm:$0xff] %v1306
          %1323 = vst [vmem:[#allocation2 + $0x10] sm:$0xff] %v1307
          %1324 = vst [vmem:[#allocation2 + $0x18] sm:$0xff] %v1308
          %1325 = vst [vmem:[#allocation2 + $0x20] sm:$0xff] %v1309
          %1326 = vst [vmem:[#allocation2 + $0x28] sm:$0xff] %v1310
          %1327 = vst [vmem:[#allocation2 + $0x30] sm:$0xff] %v1311
          %1328 = vst [vmem:[#allocation2 + $0x38] sm:$0xff] %v1312
          %1329 = vst [vmem:[#allocation2 + $0x40] sm:$0xff] %v1313
          %1330 = vst [vmem:[#allocation2 + $0x48] sm:$0xff] %v1314
          %1331 = vst [vmem:[#allocation2 + $0x50] sm:$0xff] %v1315
          %1332 = vst [vmem:[#allocation2 + $0x58] sm:$0xff] %v1316
          %1333 = vst [vmem:[#allocation2 + $0x60] sm:$0xff] %v1317
          %1334 = vst [vmem:[#allocation2 + $0x68] sm:$0xff] %v1318
          %1335 = vst [vmem:[#allocation2 + $0x70] sm:$0xff] %v1319
          %1336 = vst [vmem:[#allocation2 + $0x78] sm:$0xff] %v1320
        $region60: #{tpu_custom_call.1} parent=47 // pred_fallthru
          _
        %p1337 = scmp.eq.s32.totalorder %s27, 2
        %p1338 = pnand %p1337, %p468
        %p1339 = pneg %p1338
        // Predicated region
        $region61: #{tpu_custom_call.1} parent=47 // pred_check
          _
        $region62: #{tpu_custom_call.1} parent=47 // pred_check_branch
          %1341 = sbr.rel (%p1338) target = $region64
        $region63: #{tpu_custom_call.1} parent=47 // pred_region
          %v1342 = vld [vmem:[#allocation2] sm:$0xff]
          %v1343 = vld [vmem:[#allocation2 + $0x8] sm:$0xff]
          %v1344 = vld [vmem:[#allocation2 + $0x10] sm:$0xff]
          %v1345 = vld [vmem:[#allocation2 + $0x18] sm:$0xff]
          %v1346 = vld [vmem:[#allocation2 + $0x20] sm:$0xff]
          %v1347 = vld [vmem:[#allocation2 + $0x28] sm:$0xff]
          %v1348 = vld [vmem:[#allocation2 + $0x30] sm:$0xff]
          %v1349 = vld [vmem:[#allocation2 + $0x38] sm:$0xff]
          %v1350 = vld [vmem:[#allocation2 + $0x40] sm:$0xff]
          %v1351 = vld [vmem:[#allocation2 + $0x48] sm:$0xff]
          %v1352 = vld [vmem:[#allocation2 + $0x50] sm:$0xff]
          %v1353 = vld [vmem:[#allocation2 + $0x58] sm:$0xff]
          %v1354 = vld [vmem:[#allocation2 + $0x60] sm:$0xff]
          %v1355 = vld [vmem:[#allocation2 + $0x68] sm:$0xff]
          %v1356 = vld [vmem:[#allocation2 + $0x70] sm:$0xff]
          %v1357 = vld [vmem:[#allocation2 + $0x78] sm:$0xff]
          %v1358 = vmul.f32 %v1342, 0.33333334
          %v1359 = vmul.f32 %v1343, 0.33333334
          %v1360 = vmul.f32 %v1344, 0.33333334
          %v1361 = vmul.f32 %v1345, 0.33333334
          %v1362 = vmul.f32 %v1346, 0.33333334
          %v1363 = vmul.f32 %v1347, 0.33333334
          %v1364 = vmul.f32 %v1348, 0.33333334
          %v1365 = vmul.f32 %v1349, 0.33333334
          %v1366 = vmul.f32 %v1350, 0.33333334
          %v1367 = vmul.f32 %v1351, 0.33333334
          %v1368 = vmul.f32 %v1352, 0.33333334
          %v1369 = vmul.f32 %v1353, 0.33333334
          %v1370 = vmul.f32 %v1354, 0.33333334
          %v1371 = vmul.f32 %v1355, 0.33333334
          %v1372 = vmul.f32 %v1356, 0.33333334
          %v1373 = vmul.f32 %v1357, 0.33333334
          %1374 = vst [vmem:[%s413] sm:$0xff] %v1358
          %1375 = vst [vmem:[%s413 + $0x8] sm:$0xff] %v1359
          %1376 = vst [vmem:[%s413 + $0x10] sm:$0xff] %v1360
          %1377 = vst [vmem:[%s413 + $0x18] sm:$0xff] %v1361
          %1378 = vst [vmem:[%s413 + $0x20] sm:$0xff] %v1362
          %1379 = vst [vmem:[%s413 + $0x28] sm:$0xff] %v1363
          %1380 = vst [vmem:[%s413 + $0x30] sm:$0xff] %v1364
          %1381 = vst [vmem:[%s413 + $0x38] sm:$0xff] %v1365
          %1382 = vst [vmem:[%s413 + $0x40] sm:$0xff] %v1366
          %1383 = vst [vmem:[%s413 + $0x48] sm:$0xff] %v1367
          %1384 = vst [vmem:[%s413 + $0x50] sm:$0xff] %v1368
          %1385 = vst [vmem:[%s413 + $0x58] sm:$0xff] %v1369
          %1386 = vst [vmem:[%s413 + $0x60] sm:$0xff] %v1370
          %1387 = vst [vmem:[%s413 + $0x68] sm:$0xff] %v1371
          %1388 = vst [vmem:[%s413 + $0x70] sm:$0xff] %v1372
          %1389 = vst [vmem:[%s413 + $0x78] sm:$0xff] %v1373
        $region64: #{tpu_custom_call.1} parent=47 // pred_fallthru
          _
        %s1390 = sand.u32 %s236, 1
        %s1391 = scalar_lea.sflag [#allocation5], %s1390
        %s1392 = sand.u32 %s236, 1
        %s1393 = smul.addr %s1392, 128
        %s1394 = scalar_lea.vmem [#allocation4], %s1393
        // Predicated region
        $region65: #{tpu_custom_call.1} parent=47 // pred_check
          %p1395 = pneg %p246
        $region66: #{tpu_custom_call.1} parent=47 // pred_check_branch
          %1397 = sbr.rel (%p1395) target = $region68
        $region67: #{tpu_custom_call.1} parent=47 // pred_region
          %s1398 = smul.u32 16, %s26
          %1400 = vsyncadd %s1391, 0
          %s1401 = smul.addr %s1398, 8
          %s1402 = scalar_lea.hbm %s7, %s1401
          %s1403 = sshll.u32 %s1394, 4
          %s1404 = int_to_ptr.vmem [resolvable:$true] %s1403
          %s1405 = sshll.u32 %s1402, 4
          %s1406 = int_to_ptr.hbm [resolvable:$true] %s1405
          %1411 = dma.vmem_to_hbm [thread:$0]  %s1404, 2048, %s1406, %s1391, 128, 128, 8
        $region68: #{tpu_custom_call.1} parent=47 // pred_fallthru
          _
      $region48: #{tpu_custom_call.1} parent=5 // pred_fallthru
        _
      %p1412 = scmp.le.s32.totalorder 2, %s16
      // Predicated region
      $region69: #{tpu_custom_call.1} parent=5 // pred_check
        %p1413 = pneg %p1412
      $region70: #{tpu_custom_call.1} parent=5 // pred_check_branch
        %1415 = sbr.rel (%p1413) target = $region72
      $region71: #{tpu_custom_call.1} parent=5 // pred_region
        %s1416 = ssub.s32 %s16, 2
        // Predicated region
        $region73: #{tpu_custom_call.1} parent=71 // pred_check
          %p1417 = pneg %p252
        $region74: #{tpu_custom_call.1} parent=71 // pred_check_branch
          %1419 = sbr.rel (%p1417) target = $region76
        $region75: #{tpu_custom_call.1} parent=71 // pred_region
          %s1420 = sand.u32 %s237, 1
          %s1421 = scalar_lea.sflag [#allocation5], %s1420
          %s1422 = sand.u32 %s237, 1
          %s1423 = smul.addr %s1422, 128
          %s1424 = scalar_lea.vmem [#allocation4], %s1423
          %1426 = dma.done %s1421, 2048
        $region76: #{tpu_custom_call.1} parent=71 // pred_fallthru
          _
      $region72: #{tpu_custom_call.1} parent=5 // pred_fallthru
        _
    $region6: #{tpu_custom_call.1} parent=1 // loop_footer
      %s20 = sadd.s32 1, %s16
    $region7: #{tpu_custom_call.1} parent=1 // loop_footer_branch
      %15 = sbr.rel target = $region3
    $region8: #{tpu_custom_call.1} parent=1 // loop_exit
      _
    %1427 = vsyncpa [#allocation5], 1
    %s1428 = scalar_lea.sflag [#allocation5], 1
    %1429 = vsyncpa %s1428, 1

</llo_original>
